<compile_context>
chip_gen: v7x
topology: tpu7x:2x2x1
jax: 0.10.0
libtpu: 0.0.40
codegen_flags: <defaults>
</compile_context>

<pallas_src>
import functools

import jax
import jax.numpy as jnp
from jax.experimental import pallas as pl
from jax.experimental.pallas import tpu as pltpu

H1_PAD = 512   # 400 padded up to a multiple of 128
H2_PAD = 384   # 300 padded up to a multiple of 128


def _round_up(x, m):
    return ((x + m - 1) // m) * m


def critic_kernel(xu_ref, w1_ref, b1_ref, w2_ref, b2_ref, w3_ref, b3_ref,
                  o_ref, *, lane_dense_out):
    # Layer 1: single merged matmul over the concatenated [x, u] activation.
    # bf16 MXU inputs (cast in-kernel; bf16 inputs pass through unchanged),
    # f32 accumulation.
    xu = xu_ref[...].astype(jnp.bfloat16)
    h1 = jnp.dot(xu, w1_ref[...], preferred_element_type=jnp.float32) + b1_ref[...]
    h1 = jnp.maximum(h1, 0.0)

    # Layer 2.
    h2 = jnp.dot(h1.astype(jnp.bfloat16), w2_ref[...],
                 preferred_element_type=jnp.float32) + b2_ref[...]
    h2 = jnp.maximum(h2, 0.0)

    # Layer 3 (out_features == 1): f32 VPU multiply + XLU cross-lane reduce
    # instead of a 1-output-lane MXU matmul (keeps the head in f32).
    if lane_dense_out:
        # Lane-dense (1, tm) row -> unmasked vector stores on the output path.
        q = jnp.sum(h2 * w3_ref[...], axis=-1)[None, :] + b3_ref[...]
    else:
        # Conservative (tm, 1) column output (fallback configuration).
        q = jnp.sum(h2 * w3_ref[...], axis=-1, keepdims=True) + b3_ref[...]
    o_ref[...] = q.astype(o_ref.dtype)


def _choose_tile(batch, tm_target):
    """Adaptive batch tile.

    Small batches: a single sublane-aligned tile (no padding to a full 1K tile).
    Large batches: balanced tiles rounded to a multiple of 128 rows so the
    lane-dense output block stays (8,128)-legal and >=2 tiles feed both v7x
    TensorCores.
    """
    if batch <= tm_target:
        return max(8, _round_up(batch, 8))
    n_tiles = pl.cdiv(batch, tm_target)
    return _round_up(pl.cdiv(batch, n_tiles), 128)


def _critic_pallas_call(xu, params, tm, num_tiles, bp, *,
                        lane_dense_out, single_buffer_weights):
    w1, b1, w2, b2, w3, b3 = params
    k1 = xu.shape[1]

    def resident(arr):
        # Full-array block with a constant index_map -> weights stay
        # VMEM-resident across the whole batch loop.  pl.Buffered(1) removes
        # the duplicate pipeline buffer (~0.4 MB VMEM saved).
        if single_buffer_weights:
            return pl.BlockSpec(arr.shape, lambda i: (0, 0),
                                pipeline_mode=pl.Buffered(1))
        return pl.BlockSpec(arr.shape, lambda i: (0, 0))

    if lane_dense_out:
        out_shape = jax.ShapeDtypeStruct((1, bp), jnp.float32)
        out_spec = pl.BlockSpec((1, tm), lambda i: (0, i))
    else:
        out_shape = jax.ShapeDtypeStruct((bp, 1), jnp.float32)
        out_spec = pl.BlockSpec((tm, 1), lambda i: (i, 0))

    kernel = functools.partial(critic_kernel, lane_dense_out=lane_dense_out)
    return pl.pallas_call(
        kernel,
        out_shape=out_shape,
        grid=(num_tiles,),
        in_specs=[
            pl.BlockSpec((tm, k1), lambda i: (i, 0)),
            resident(w1), resident(b1),
            resident(w2), resident(b2),
            resident(w3), resident(b3),
        ],
        out_specs=out_spec,
        compiler_params=pltpu.CompilerParams(
            dimension_semantics=("parallel",),
            # Explicit scoped-VMEM budget: large tiles exceed v5e's 16 MiB
            # default; 48 MiB still fits under v7x's 64 MiB physical VMEM.
            vmem_limit_bytes=48 * 1024 * 1024),
    )(xu, w1, b1, w2, b2, w3, b3)


def critic_forward(x, u, params, *, tm_target=1024):
    """x: (B, state_dim), u: (B, action_dim) -> (B, 1) f32.

    Inputs may be f32 or bf16 (the bf16 cast happens inside the kernel, so a
    producer that already emits bf16 activations halves input HBM traffic).
    """
    B = x.shape[0]
    # Merged layer-1 operand: the concat is over ~12 columns, negligible cost,
    # and lets layer 1 issue as a single K=12 matmul in the kernel.
    xu = jnp.concatenate([x, u], axis=1)

    tm = _choose_tile(B, tm_target)
    num_tiles = pl.cdiv(B, tm)
    bp = num_tiles * tm
    if bp != B:
        xu = jnp.pad(xu, ((0, bp - B), (0, 0)))

    try:
        # Preferred configuration: lane-dense output + single-buffered weights.
        out = _critic_pallas_call(xu, params, tm, num_tiles, bp,
                                  lane_dense_out=True,
                                  single_buffer_weights=True)
        return out[0, :B][:, None]
    except Exception:
        # Conservative fallback (previously validated structure): column
        # output + default double-buffered resident weights.
        out = _critic_pallas_call(xu, params, tm, num_tiles, bp,
                                  lane_dense_out=False,
                                  single_buffer_weights=False)
        return out[:B]


def init_torch_style_params(key, state_dim, action_dim):
    """f32 params in the PyTorch nn.Linear convention: W (out, in), b (out,),
    init U(-1/sqrt(fan_in), 1/sqrt(fan_in))."""
    dims = [(state_dim + action_dim, 400), (400, 300), (300, 1)]
    keys = jax.random.split(key, 6)
    params = []
    for i, (din, dout) in enumerate(dims):
        bound = 1.0 / float(din) ** 0.5
        w = jax.random.uniform(keys[2 * i], (dout, din), jnp.float32, -bound, bound)
        b = jax.random.uniform(keys[2 * i + 1], (dout,), jnp.float32, -bound, bound)
        params += [w, b]
    return tuple(params)


def prepare_critic_params(torch_params):
    """Transpose to (in, out), zero-pad hidden widths to lane multiples of 128,
    cast the large weights to bf16.  Layer 1 stays one (sd+ad, 512) weight so
    the kernel issues a single merged matmul."""
    w1, b1, w2, b2, w3, b3 = torch_params
    h1, h2 = w1.shape[0], w2.shape[0]          # 400, 300

    w1p = jnp.pad(w1.T, ((0, 0), (0, H1_PAD - h1)))               # (sd+ad, 512)
    b1p = jnp.pad(b1, (0, H1_PAD - h1)).reshape(1, H1_PAD)

    w2p = jnp.pad(w2.T, ((0, H1_PAD - h1), (0, H2_PAD - h2)))     # (512, 384)
    b2p = jnp.pad(b2, (0, H2_PAD - h2)).reshape(1, H2_PAD)

    w3row = jnp.pad(w3, ((0, 0), (0, H2_PAD - h2)))               # (1, 384) f32
    b3p = b3.reshape(1, 1)

    return (w1p.astype(jnp.bfloat16), b1p,
            w2p.astype(jnp.bfloat16), b2p,
            w3row, b3p)


def critic_reference_f32(x, u, torch_params):
    """Exact PyTorch-semantics forward in pure f32 (concat, unpadded)."""
    w1, b1, w2, b2, w3, b3 = torch_params
    h = jnp.concatenate([x, u], axis=1)
    h = jnp.maximum(h @ w1.T + b1, 0.0)
    h = jnp.maximum(h @ w2.T + b2, 0.0)
    return h @ w3.T + b3


def critic_reference_mirrored(x, u, params):
    """Same numerics as the kernel (bf16 matmul inputs, f32 accumulation)."""
    w1, b1, w2, b2, w3, b3 = params
    xu = jnp.concatenate([x, u], axis=1).astype(jnp.bfloat16)
    h1 = jnp.maximum(
        jnp.dot(xu, w1, preferred_element_type=jnp.float32) + b1, 0.0)
    h2 = jnp.maximum(
        jnp.dot(h1.astype(jnp.bfloat16), w2,
                preferred_element_type=jnp.float32) + b2, 0.0)
    return jnp.sum(h2 * w3, axis=-1, keepdims=True) + b3


if __name__ == "__main__":
    B, state_dim, action_dim = 2, 8, 4

    key = jax.random.PRNGKey(0)
    kx, ku, kp = jax.random.split(key, 3)
    x = jax.random.normal(kx, (B, state_dim), jnp.float32)
    u = jax.random.normal(ku, (B, action_dim), jnp.float32)

    torch_params = init_torch_style_params(kp, state_dim, action_dim)
    params = prepare_critic_params(torch_params)

    q = critic_forward(x, u, params)
    q = jax.block_until_ready(q)
    assert q.shape == (B, 1)

    # Tight check against a reference that mirrors the kernel's precision.
    q_mirror = critic_reference_mirrored(x, u, params)
    assert jnp.allclose(q, q_mirror, atol=2e-3, rtol=2e-3), \
        float(jnp.max(jnp.abs(q - q_mirror)))

    # Loose semantic check against the exact f32 PyTorch-style forward
    # (difference is only the deliberate bf16 weight/activation rounding).
    q_f32 = critic_reference_f32(x, u, torch_params)
    assert jnp.allclose(q, q_f32, atol=5e-2, rtol=5e-2), \
        float(jnp.max(jnp.abs(q - q_f32)))

    print("KERNEL_OK")
</pallas_src>

<mosaic_0001>
module attributes {stable_mosaic.version = 11 : i64} {
  func.func @critic_kernel(%arg0: i32, %arg1: memref<8x12xf32, #tpu.memory_space<vmem>>, %arg2: memref<12x512xbf16, #tpu.memory_space<vmem>>, %arg3: memref<1x512xf32, #tpu.memory_space<vmem>>, %arg4: memref<512x384xbf16, #tpu.memory_space<vmem>>, %arg5: memref<1x384xf32, #tpu.memory_space<vmem>>, %arg6: memref<1x384xf32, #tpu.memory_space<vmem>>, %arg7: memref<1x1xf32, #tpu.memory_space<vmem>>, %arg8: memref<1x8xf32, #tpu.memory_space<vmem>>) attributes {dimension_semantics = [#tpu.dimension_semantics<parallel>], iteration_bounds = array<i64: 1>, scalar_prefetch = 0 : i64, scratch_operands = 0 : i64, tpu.core_type = #tpu.core_type<tc>, window_params = [{transform_indices = @transform_0, window_bounds = array<i64: 8, 12>}, {pipeline_mode = #tpu.pipeline_mode<synchronous>, transform_indices = @transform_1, window_bounds = array<i64: 12, 512>}, {pipeline_mode = #tpu.pipeline_mode<synchronous>, transform_indices = @transform_2, window_bounds = array<i64: 1, 512>}, {pipeline_mode = #tpu.pipeline_mode<synchronous>, transform_indices = @transform_3, window_bounds = array<i64: 512, 384>}, {pipeline_mode = #tpu.pipeline_mode<synchronous>, transform_indices = @transform_4, window_bounds = array<i64: 1, 384>}, {pipeline_mode = #tpu.pipeline_mode<synchronous>, transform_indices = @transform_5, window_bounds = array<i64: 1, 384>}, {pipeline_mode = #tpu.pipeline_mode<synchronous>, transform_indices = @transform_6, window_bounds = array<i64: 1, 1>}, {transform_indices = @transform_7, window_bounds = array<i64: 1, 8>}]} {
    %c0 = arith.constant 0 : index
    %c0_0 = arith.constant 0 : index
    %0 = vector.load %arg1[%c0, %c0_0] : memref<8x12xf32, #tpu.memory_space<vmem>>, vector<8x12xf32>
    %1 = arith.truncf %0 : vector<8x12xf32> to vector<8x12xbf16>
    %c0_1 = arith.constant 0 : index
    %c0_2 = arith.constant 0 : index
    %2 = vector.load %arg2[%c0_1, %c0_2] : memref<12x512xbf16, #tpu.memory_space<vmem>>, vector<12x512xbf16>
    %cst = arith.constant dense<0.000000e+00> : vector<8x512xf32>
    %3 = tpu.matmul %1, %2, %cst {dimension_numbers = #tpu.dot_dimension_numbers<[1], [0], [0], [1], [0, 0, 1, 1], [], []>} : vector<8x12xbf16>, vector<12x512xbf16>, vector<8x512xf32> -> vector<8x512xf32>
    %c0_3 = arith.constant 0 : index
    %c0_4 = arith.constant 0 : index
    %4 = vector.load %arg3[%c0_3, %c0_4] : memref<1x512xf32, #tpu.memory_space<vmem>>, vector<1x512xf32>
    %5 = vector.broadcast %4 : vector<1x512xf32> to vector<8x512xf32>
    %6 = arith.addf %3, %5 : vector<8x512xf32>
    %cst_5 = arith.constant 0.000000e+00 : f32
    %7 = vector.broadcast %cst_5 : f32 to vector<8x512xf32>
    %8 = arith.maximumf %6, %7 : vector<8x512xf32>
    %9 = arith.truncf %8 : vector<8x512xf32> to vector<8x512xbf16>
    %c0_6 = arith.constant 0 : index
    %c0_7 = arith.constant 0 : index
    %10 = vector.load %arg4[%c0_6, %c0_7] : memref<512x384xbf16, #tpu.memory_space<vmem>>, vector<512x384xbf16>
    %cst_8 = arith.constant dense<0.000000e+00> : vector<8x384xf32>
    %11 = tpu.matmul %9, %10, %cst_8 {dimension_numbers = #tpu.dot_dimension_numbers<[1], [0], [0], [1], [0, 0, 1, 1], [], []>} : vector<8x512xbf16>, vector<512x384xbf16>, vector<8x384xf32> -> vector<8x384xf32>
    %c0_9 = arith.constant 0 : index
    %c0_10 = arith.constant 0 : index
    %12 = vector.load %arg5[%c0_9, %c0_10] : memref<1x384xf32, #tpu.memory_space<vmem>>, vector<1x384xf32>
    %13 = vector.broadcast %12 : vector<1x384xf32> to vector<8x384xf32>
    %14 = arith.addf %11, %13 : vector<8x384xf32>
    %cst_11 = arith.constant 0.000000e+00 : f32
    %15 = vector.broadcast %cst_11 : f32 to vector<8x384xf32>
    %16 = arith.maximumf %14, %15 : vector<8x384xf32>
    %c0_12 = arith.constant 0 : index
    %c0_13 = arith.constant 0 : index
    %17 = vector.load %arg6[%c0_12, %c0_13] : memref<1x384xf32, #tpu.memory_space<vmem>>, vector<1x384xf32>
    %18 = vector.broadcast %17 : vector<1x384xf32> to vector<8x384xf32>
    %19 = arith.mulf %16, %18 : vector<8x384xf32>
    %cst_14 = arith.constant dense<0.000000e+00> : vector<8xf32>
    %20 = vector.multi_reduction <add>, %19, %cst_14 [1] : vector<8x384xf32> to vector<8xf32>
    %21 = vector.shape_cast %20 : vector<8xf32> to vector<1x8xf32>
    %c0_15 = arith.constant 0 : index
    %c0_16 = arith.constant 0 : index
    %22 = vector.load %arg7[%c0_15, %c0_16] : memref<1x1xf32, #tpu.memory_space<vmem>>, vector<1x1xf32>
    %23 = vector.broadcast %22 : vector<1x1xf32> to vector<1x8xf32>
    %24 = arith.addf %21, %23 : vector<1x8xf32>
    %c0_17 = arith.constant 0 : index
    %c0_18 = arith.constant 0 : index
    %25 = vector.load %arg8[%c0_17, %c0_18] : memref<1x8xf32, #tpu.memory_space<vmem>>, vector<1x8xf32>
    tpu.vector_store %arg8[%c0_17, %c0_18], %24 {strides = array<i32>} : memref<1x8xf32, #tpu.memory_space<vmem>>, vector<1x8xf32>,
    return
  }
  func.func @transform_0(%arg0: i32) -> (i32, i32) {
    %c0_i32 = arith.constant 0 : i32
    %c0_i32_0 = arith.constant 0 : i32
    return %arg0, %c0_i32 : i32, i32
  }
  func.func @transform_1(%arg0: i32) -> (i32, i32) {
    %c0_i32 = arith.constant 0 : i32
    %c0_i32_0 = arith.constant 0 : i32
    %c0_i32_1 = arith.constant 0 : i32
    return %c0_i32, %c0_i32_0 : i32, i32
  }
  func.func @transform_2(%arg0: i32) -> (i32, i32) {
    %c0_i32 = arith.constant 0 : i32
    %c0_i32_0 = arith.constant 0 : i32
    %c0_i32_1 = arith.constant 0 : i32
    return %c0_i32, %c0_i32_0 : i32, i32
  }
  func.func @transform_3(%arg0: i32) -> (i32, i32) {
    %c0_i32 = arith.constant 0 : i32
    %c0_i32_0 = arith.constant 0 : i32
    %c0_i32_1 = arith.constant 0 : i32
    return %c0_i32, %c0_i32_0 : i32, i32
  }
  func.func @transform_4(%arg0: i32) -> (i32, i32) {
    %c0_i32 = arith.constant 0 : i32
    %c0_i32_0 = arith.constant 0 : i32
    %c0_i32_1 = arith.constant 0 : i32
    return %c0_i32, %c0_i32_0 : i32, i32
  }
  func.func @transform_5(%arg0: i32) -> (i32, i32) {
    %c0_i32 = arith.constant 0 : i32
    %c0_i32_0 = arith.constant 0 : i32
    %c0_i32_1 = arith.constant 0 : i32
    return %c0_i32, %c0_i32_0 : i32, i32
  }
  func.func @transform_6(%arg0: i32) -> (i32, i32) {
    %c0_i32 = arith.constant 0 : i32
    %c0_i32_0 = arith.constant 0 : i32
    %c0_i32_1 = arith.constant 0 : i32
    return %c0_i32, %c0_i32_0 : i32, i32
  }
  func.func @transform_7(%arg0: i32) -> (i32, i32) {
    %c0_i32 = arith.constant 0 : i32
    %c0_i32_0 = arith.constant 0 : i32
    return %c0_i32, %arg0 : i32, i32
  }
}

module attributes {stable_mosaic.version = 11 : i64} {
  func.func @critic_kernel(%arg0: i32, %arg1: memref<8x12xf32, #tpu.memory_space<vmem>>, %arg2: memref<12x512xbf16, #tpu.memory_space<vmem>>, %arg3: memref<1x512xf32, #tpu.memory_space<vmem>>, %arg4: memref<512x384xbf16, #tpu.memory_space<vmem>>, %arg5: memref<1x384xf32, #tpu.memory_space<vmem>>, %arg6: memref<1x384xf32, #tpu.memory_space<vmem>>, %arg7: memref<1x1xf32, #tpu.memory_space<vmem>>, %arg8: memref<8x1xf32, #tpu.memory_space<vmem>>) attributes {dimension_semantics = [#tpu.dimension_semantics<parallel>], iteration_bounds = array<i64: 1>, scalar_prefetch = 0 : i64, scratch_operands = 0 : i64, tpu.core_type = #tpu.core_type<tc>, window_params = [{transform_indices = @transform_0, window_bounds = array<i64: 8, 12>}, {pipeline_mode = #tpu.pipeline_mode<synchronous>, transform_indices = @transform_1, window_bounds = array<i64: 12, 512>}, {pipeline_mode = #tpu.pipeline_mode<synchronous>, transform_indices = @transform_2, window_bounds = array<i64: 1, 512>}, {pipeline_mode = #tpu.pipeline_mode<synchronous>, transform_indices = @transform_3, window_bounds = array<i64: 512, 384>}, {pipeline_mode = #tpu.pipeline_mode<synchronous>, transform_indices = @transform_4, window_bounds = array<i64: 1, 384>}, {pipeline_mode = #tpu.pipeline_mode<synchronous>, transform_indices = @transform_5, window_bounds = array<i64: 1, 384>}, {pipeline_mode = #tpu.pipeline_mode<synchronous>, transform_indices = @transform_6, window_bounds = array<i64: 1, 1>}, {transform_indices = @transform_7, window_bounds = array<i64: 8, 1>}]} {
    %c0 = arith.constant 0 : index
    %c0_0 = arith.constant 0 : index
    %0 = vector.load %arg1[%c0, %c0_0] : memref<8x12xf32, #tpu.memory_space<vmem>>, vector<8x12xf32>
    %1 = arith.truncf %0 : vector<8x12xf32> to vector<8x12xbf16>
    %c0_1 = arith.constant 0 : index
    %c0_2 = arith.constant 0 : index
    %2 = vector.load %arg2[%c0_1, %c0_2] : memref<12x512xbf16, #tpu.memory_space<vmem>>, vector<12x512xbf16>
    %cst = arith.constant dense<0.000000e+00> : vector<8x512xf32>
    %3 = tpu.matmul %1, %2, %cst {dimension_numbers = #tpu.dot_dimension_numbers<[1], [0], [0], [1], [0, 0, 1, 1], [], []>} : vector<8x12xbf16>, vector<12x512xbf16>, vector<8x512xf32> -> vector<8x512xf32>
    %c0_3 = arith.constant 0 : index
    %c0_4 = arith.constant 0 : index
    %4 = vector.load %arg3[%c0_3, %c0_4] : memref<1x512xf32, #tpu.memory_space<vmem>>, vector<1x512xf32>
    %5 = vector.broadcast %4 : vector<1x512xf32> to vector<8x512xf32>
    %6 = arith.addf %3, %5 : vector<8x512xf32>
    %cst_5 = arith.constant 0.000000e+00 : f32
    %7 = vector.broadcast %cst_5 : f32 to vector<8x512xf32>
    %8 = arith.maximumf %6, %7 : vector<8x512xf32>
    %9 = arith.truncf %8 : vector<8x512xf32> to vector<8x512xbf16>
    %c0_6 = arith.constant 0 : index
    %c0_7 = arith.constant 0 : index
    %10 = vector.load %arg4[%c0_6, %c0_7] : memref<512x384xbf16, #tpu.memory_space<vmem>>, vector<512x384xbf16>
    %cst_8 = arith.constant dense<0.000000e+00> : vector<8x384xf32>
    %11 = tpu.matmul %9, %10, %cst_8 {dimension_numbers = #tpu.dot_dimension_numbers<[1], [0], [0], [1], [0, 0, 1, 1], [], []>} : vector<8x512xbf16>, vector<512x384xbf16>, vector<8x384xf32> -> vector<8x384xf32>
    %c0_9 = arith.constant 0 : index
    %c0_10 = arith.constant 0 : index
    %12 = vector.load %arg5[%c0_9, %c0_10] : memref<1x384xf32, #tpu.memory_space<vmem>>, vector<1x384xf32>
    %13 = vector.broadcast %12 : vector<1x384xf32> to vector<8x384xf32>
    %14 = arith.addf %11, %13 : vector<8x384xf32>
    %cst_11 = arith.constant 0.000000e+00 : f32
    %15 = vector.broadcast %cst_11 : f32 to vector<8x384xf32>
    %16 = arith.maximumf %14, %15 : vector<8x384xf32>
    %c0_12 = arith.constant 0 : index
    %c0_13 = arith.constant 0 : index
    %17 = vector.load %arg6[%c0_12, %c0_13] : memref<1x384xf32, #tpu.memory_space<vmem>>, vector<1x384xf32>
    %18 = vector.broadcast %17 : vector<1x384xf32> to vector<8x384xf32>
    %19 = arith.mulf %16, %18 : vector<8x384xf32>
    %cst_14 = arith.constant dense<0.000000e+00> : vector<8xf32>
    %20 = vector.multi_reduction <add>, %19, %cst_14 [1] : vector<8x384xf32> to vector<8xf32>
    %21 = vector.shape_cast %20 : vector<8xf32> to vector<8x1xf32>
    %c0_15 = arith.constant 0 : index
    %c0_16 = arith.constant 0 : index
    %22 = vector.load %arg7[%c0_15, %c0_16] : memref<1x1xf32, #tpu.memory_space<vmem>>, vector<1x1xf32>
    %23 = vector.broadcast %22 : vector<1x1xf32> to vector<8x1xf32>
    %24 = arith.addf %21, %23 : vector<8x1xf32>
    %c0_17 = arith.constant 0 : index
    %c0_18 = arith.constant 0 : index
    %25 = vector.load %arg8[%c0_17, %c0_18] : memref<8x1xf32, #tpu.memory_space<vmem>>, vector<8x1xf32>
    tpu.vector_store %arg8[%c0_17, %c0_18], %24 {strides = array<i32>} : memref<8x1xf32, #tpu.memory_space<vmem>>, vector<8x1xf32>,
    return
  }
  func.func @transform_0(%arg0: i32) -> (i32, i32) {
    %c0_i32 = arith.constant 0 : i32
    %c0_i32_0 = arith.constant 0 : i32
    return %arg0, %c0_i32 : i32, i32
  }
  func.func @transform_1(%arg0: i32) -> (i32, i32) {
    %c0_i32 = arith.constant 0 : i32
    %c0_i32_0 = arith.constant 0 : i32
    %c0_i32_1 = arith.constant 0 : i32
    return %c0_i32, %c0_i32_0 : i32, i32
  }
  func.func @transform_2(%arg0: i32) -> (i32, i32) {
    %c0_i32 = arith.constant 0 : i32
    %c0_i32_0 = arith.constant 0 : i32
    %c0_i32_1 = arith.constant 0 : i32
    return %c0_i32, %c0_i32_0 : i32, i32
  }
  func.func @transform_3(%arg0: i32) -> (i32, i32) {
    %c0_i32 = arith.constant 0 : i32
    %c0_i32_0 = arith.constant 0 : i32
    %c0_i32_1 = arith.constant 0 : i32
    return %c0_i32, %c0_i32_0 : i32, i32
  }
  func.func @transform_4(%arg0: i32) -> (i32, i32) {
    %c0_i32 = arith.constant 0 : i32
    %c0_i32_0 = arith.constant 0 : i32
    %c0_i32_1 = arith.constant 0 : i32
    return %c0_i32, %c0_i32_0 : i32, i32
  }
  func.func @transform_5(%arg0: i32) -> (i32, i32) {
    %c0_i32 = arith.constant 0 : i32
    %c0_i32_0 = arith.constant 0 : i32
    %c0_i32_1 = arith.constant 0 : i32
    return %c0_i32, %c0_i32_0 : i32, i32
  }
  func.func @transform_6(%arg0: i32) -> (i32, i32) {
    %c0_i32 = arith.constant 0 : i32
    %c0_i32_0 = arith.constant 0 : i32
    %c0_i32_1 = arith.constant 0 : i32
    return %c0_i32, %c0_i32_0 : i32, i32
  }
  func.func @transform_7(%arg0: i32) -> (i32, i32) {
    %c0_i32 = arith.constant 0 : i32
    %c0_i32_0 = arith.constant 0 : i32
    return %arg0, %c0_i32 : i32, i32
  }
}

</mosaic_0001>

<llo_original>
// kernel: tpu_custom_call.1
$region0: #{tpu_custom_call.1}
  #allocation0 [shape = 'u32[]', space=smem, size = 0x4, offset = 0x4, fixed_abs, tag = 'smem constant byte address 0x4 - core index']
  #allocation1 [shape = 'u32[144,128]{1,0:T(1,128)}', space=vmem, size = 0x12000, scoped, tag = 'internal scratch']
  #allocation2 [shape = 'f32[1,1]{1,0:T(1,128)S(1)}', space=vmem, size = 0x200, scoped, tag = 'scoped memory for tpu_custom_call.1']
  %s0 = inlined_call_operand.hbm [shape: f32[8,12], index: 0, kind: input, shape index: {}]
  %s1 = inlined_call_operand.hbm [shape: bf16[12,512], index: 1, kind: input, shape index: {}]
  %s2 = inlined_call_operand.vmem [shape: f32[1,512], index: 2, kind: input, shape index: {}]
  %s3 = inlined_call_operand.hbm [shape: bf16[512,384], index: 3, kind: input, shape index: {}]
  %s4 = inlined_call_operand.vmem [shape: f32[1,384], index: 4, kind: input, shape index: {}]
  %s5 = inlined_call_operand.vmem [shape: f32[1,384], index: 5, kind: input, shape index: {}]
  %s6 = inlined_call_operand.<no memory space> [shape: f32[1,1], index: 6, kind: input, shape index: {}]
  %s7 = inlined_call_operand.hbm [shape: f32[1,8], index: 7, kind: output, shape index: {}]
  %s8 = sld [smem:[#allocation0]]
  $region50: #{tpu_custom_call.1} parent=0
    _
  %s10 = ssub.s32 1, %s8
  %s11 = scalar_select 0, %s10, %s8
  %v12 = vstv %s6
  %13 = vst [vmem:[#allocation2] sm:$0x1] %v12
  $region1: #{tpu_custom_call.1} parent=0
    #allocation3 [shape = 'u8[4096]{0}', space=vmem, size = 0x1000, scoped, tag = 'input window, operand 0, single buffered']
    #allocation4 [shape = 's32[1]{0}', space=sflag, size = 0x4, scoped, tag = 'scoped memory for tpu_custom_call.1']
    #allocation5 [shape = 's32[1]{0}', space=sflag, size = 0x4, scoped, tag = 'scoped memory for tpu_custom_call.1']
    #allocation6 [shape = 'u8[16384]{0}', space=vmem, size = 0x4000, scoped, tag = 'input window, operand 1, single buffered']
    #allocation7 [shape = 's32[1]{0}', space=sflag, size = 0x4, scoped, tag = 'scoped memory for tpu_custom_call.1']
    #allocation8 [shape = 'u8[393216]{0}', space=vmem, size = 0x60000, scoped, tag = 'input window, operand 3, single buffered']
    #allocation9 [shape = 'u8[512]{0}', space=vmem, size = 0x400, scoped, tag = 'output window, operand 0, single buffered']
    %14 = vsyncpa [#allocation4], 0
    %15 = vsyncpa [#allocation7], 0
    %16 = vsyncpa [#allocation5], 0
    // Predicated region
    $region2: #{tpu_custom_call.1} parent=1 // pred_check
      _
    $region3: #{tpu_custom_call.1} parent=1 // pred_check_branch
      %18 = sbr.rel (0) target = $region5
    $region4: #{tpu_custom_call.1} parent=1 // pred_region
      %s20 = ssub.s32 128, 128
      %21 = vsyncadd [#allocation4], %s20
      %s23 = sshll.u32 [#allocation3], 4
      %s24 = int_to_ptr.vmem [resolvable:$true] %s23
      %26 = dma.hbm_to_vmem [thread:$0]  %s0, 128, %s24, [#allocation4]
    $region5: #{tpu_custom_call.1} parent=1 // pred_fallthru
      _
    // Predicated region
    $region6: #{tpu_custom_call.1} parent=1 // pred_check
      _
    $region7: #{tpu_custom_call.1} parent=1 // pred_check_branch
      %28 = sbr.rel (0) target = $region9
    $region8: #{tpu_custom_call.1} parent=1 // pred_region
      %s30 = ssub.s32 512, 512
      %31 = vsyncadd [#allocation7], %s30
      %s32 = sshll.u32 [#allocation6], 4
      %s33 = int_to_ptr.vmem [resolvable:$true] %s32
      %38 = dma.hbm_to_vmem [thread:$0]  %s1, 512, %s33, [#allocation7], 256, 256, 16
    $region9: #{tpu_custom_call.1} parent=1 // pred_fallthru
      _
    // Predicated region
    $region10: #{tpu_custom_call.1} parent=1 // pred_check
      _
    $region11: #{tpu_custom_call.1} parent=1 // pred_check_branch
      %40 = sbr.rel (0) target = $region13
    $region12: #{tpu_custom_call.1} parent=1 // pred_region
      _
    $region13: #{tpu_custom_call.1} parent=1 // pred_fallthru
      _
    // Predicated region
    $region14: #{tpu_custom_call.1} parent=1 // pred_check
      _
    $region15: #{tpu_custom_call.1} parent=1 // pred_check_branch
      %42 = sbr.rel (0) target = $region17
    $region16: #{tpu_custom_call.1} parent=1 // pred_region
      %s44 = ssub.s32 12288, 12288
      %45 = vsyncadd [#allocation7], %s44
      %s46 = sshll.u32 [#allocation8], 4
      %s47 = int_to_ptr.vmem [resolvable:$true] %s46
      %52 = dma.hbm_to_vmem [thread:$0]  %s3, 12288, %s47, [#allocation7], 192, 192, 12
    $region17: #{tpu_custom_call.1} parent=1 // pred_fallthru
      _
    // Predicated region
    $region18: #{tpu_custom_call.1} parent=1 // pred_check
      _
    $region19: #{tpu_custom_call.1} parent=1 // pred_check_branch
      %54 = sbr.rel (0) target = $region21
    $region20: #{tpu_custom_call.1} parent=1 // pred_region
      _
    $region21: #{tpu_custom_call.1} parent=1 // pred_fallthru
      _
    // Predicated region
    $region22: #{tpu_custom_call.1} parent=1 // pred_check
      _
    $region23: #{tpu_custom_call.1} parent=1 // pred_check_branch
      %56 = sbr.rel (0) target = $region25
    $region24: #{tpu_custom_call.1} parent=1 // pred_region
      _
    $region25: #{tpu_custom_call.1} parent=1 // pred_fallthru
      _
    // Predicated region
    $region26: #{tpu_custom_call.1} parent=1 // pred_check
      _
    $region27: #{tpu_custom_call.1} parent=1 // pred_check_branch
      %58 = sbr.rel (0) target = $region29
    $region28: #{tpu_custom_call.1} parent=1 // pred_region
      _
    $region29: #{tpu_custom_call.1} parent=1 // pred_fallthru
      _
    // Predicated region
    $region30: #{tpu_custom_call.1} parent=1 // pred_check
      _
    $region31: #{tpu_custom_call.1} parent=1 // pred_check_branch
      %60 = sbr.rel (0) target = $region33
    $region32: #{tpu_custom_call.1} parent=1 // pred_region
      %61 = dma.done [#allocation4], 128
    $region33: #{tpu_custom_call.1} parent=1 // pred_fallthru
      _
    // Predicated region
    $region34: #{tpu_custom_call.1} parent=1 // pred_check
      _
    $region35: #{tpu_custom_call.1} parent=1 // pred_check_branch
      %63 = sbr.rel (0) target = $region37
    $region36: #{tpu_custom_call.1} parent=1 // pred_region
      %64 = dma.done [#allocation7], 512
    $region37: #{tpu_custom_call.1} parent=1 // pred_fallthru
      _
    // Predicated region
    $region38: #{tpu_custom_call.1} parent=1 // pred_check
      _
    $region39: #{tpu_custom_call.1} parent=1 // pred_check_branch
      %66 = sbr.rel (0) target = $region41
    $region40: #{tpu_custom_call.1} parent=1 // pred_region
      %67 = dma.done [#allocation7], 12288
    $region41: #{tpu_custom_call.1} parent=1 // pred_fallthru
      _
    %v69 = vld [vmem:[#allocation3] sm:$0xff]
    %v70 = vpack.c.bf16 %v69, %v69
    %v71 = vld [vmem:[#allocation6] sm:$0xff]
    %v72 = vld [vmem:[#allocation6 + $0x8] sm:$0xff]
    %v73 = vld [vmem:[#allocation6 + $0x10] sm:$0x33]
    %v74 = vld [vmem:[#allocation6 + $0x18] sm:$0x33]
    %v75 = vld [vmem:[%s2] sm:$0xf]
    %v77 = vlaneseq
    %v78 = vshrl.u32 %v77, 7
    %v79 = vsub.s32 0, %v78
    %v80 = vrot.slane %v75, %v79
    %v81 = vlaneseq
    %v82 = vshrl.u32 %v81, 7
    %v83 = vsub.s32 1, %v82
    %v84 = vrot.slane %v75, %v83
    %v85 = vlaneseq
    %v86 = vshrl.u32 %v85, 7
    %v87 = vsub.s32 2, %v86
    %v88 = vrot.slane %v75, %v87
    %v89 = vlaneseq
    %v90 = vshrl.u32 %v89, 7
    %v91 = vsub.s32 3, %v90
    %v92 = vrot.slane %v75, %v91
    %v101 = vunpack.c.l.b16 %v71
    %v102 = vunpack.c.h.b16 %v71
    %v103 = vunpack.c.l.b16 %v72
    %v104 = vunpack.c.h.b16 %v72
    %v105 = vunpack.c.l.b16 %v73
    %v106 = vunpack.c.h.b16 %v73
    %v107 = vunpack.c.l.b16 %v74
    %v108 = vunpack.c.h.b16 %v74
    %v109 = vpack.c.b16 %v105, %v101
    %v110 = vpack.c.b16 %v106, %v102
    %v111 = vpack.c.b16 %v107, %v103
    %v112 = vpack.c.b16 %v108, %v104
    %vm113 = vcmask 97280
    %v115 = vsel %vm113, %v70, 0
    %vm117 = vcmask 1045504
    %v119 = vsel %vm117, %v109, 0
    %v122 = vsel %vm117, %v110, 0
    %v125 = vsel %vm117, %v111, 0
    %v128 = vsel %vm117, %v112, 0
    %130 = vmatprep.subr.bf16.mxu0 %v122
    %131 = vmatpush1.bf16.msra.mxu0 %v119
    %132 = vmatprep.subr.bf16.mxu0 0
    %133 = vmatpush1.bf16.msra.mxu0 0
    %134 = vmatprep.subr.bf16.mxu0 0
    %135 = vmatpush1.bf16.msra.mxu0 0
    %136 = vmatprep.subr.bf16.mxu0 0
    %137 = vmatpush1.bf16.msra.mxu0 0
    %138 = vmatprep.subr.bf16.mxu0 0
    %139 = vmatpush1.bf16.msra.mxu0 0
    %140 = vmatprep.subr.bf16.mxu0 0
    %141 = vmatpush1.bf16.msra.mxu0 0
    %142 = vmatprep.subr.bf16.mxu0 0
    %143 = vmatpush1.bf16.msra.mxu0 0
    %144 = vmatprep.subr.bf16.mxu0 0
    %145 = vmatpush1.bf16.msra.mxu0 0
    %146 = vmatprep.subr.bf16.mxu0 0
    %147 = vmatpush1.bf16.msra.mxu0 0
    %148 = vmatprep.subr.bf16.mxu0 0
    %149 = vmatpush1.bf16.msra.mxu0 0
    %150 = vmatprep.subr.bf16.mxu0 0
    %151 = vmatpush1.bf16.msra.mxu0 0
    %152 = vmatprep.subr.bf16.mxu0 0
    %153 = vmatpush1.bf16.msra.mxu0 0
    %154 = vmatprep.subr.bf16.mxu0 0
    %155 = vmatpush1.bf16.msra.mxu0 0
    %156 = vmatprep.subr.bf16.mxu0 0
    %157 = vmatpush1.bf16.msra.mxu0 0
    %158 = vmatprep.subr.bf16.mxu0 0
    %159 = vmatpush1.bf16.msra.mxu0 0
    %160 = vmatprep.subr.bf16.mxu0 0
    %161 = vmatpush1.bf16.msra.mxu0 0
    %162 = vmatprep.mubr.bf16.mxu0 0
    %163 = vmatmul.mubr.bf16.gmra.mrb[0].mxu0 %v115
    %v164 = vpop.f32.mrb[0].mxu0
    %v165 = vadd.f32 %v80, %v164
    %v166 = vpop.f32.mrb[0].mxu0
    %v167 = vadd.f32 %v84, %v166
    %v168 = vpop.f32.mrb[0].mxu0
    %v169 = vpop.f32.mrb[0].mxu0
    %170 = vdwg.mxu0
    %171 = vmatprep.subr.bf16.mxu0 %v128
    %172 = vmatpush1.bf16.msra.mxu0 %v125
    %173 = vmatprep.subr.bf16.mxu0 0
    %174 = vmatpush1.bf16.msra.mxu0 0
    %175 = vmatprep.subr.bf16.mxu0 0
    %176 = vmatpush1.bf16.msra.mxu0 0
    %177 = vmatprep.subr.bf16.mxu0 0
    %178 = vmatpush1.bf16.msra.mxu0 0
    %179 = vmatprep.subr.bf16.mxu0 0
    %180 = vmatpush1.bf16.msra.mxu0 0
    %181 = vmatprep.subr.bf16.mxu0 0
    %182 = vmatpush1.bf16.msra.mxu0 0
    %183 = vmatprep.subr.bf16.mxu0 0
    %184 = vmatpush1.bf16.msra.mxu0 0
    %185 = vmatprep.subr.bf16.mxu0 0
    %186 = vmatpush1.bf16.msra.mxu0 0
    %187 = vmatprep.subr.bf16.mxu0 0
    %188 = vmatpush1.bf16.msra.mxu0 0
    %189 = vmatprep.subr.bf16.mxu0 0
    %190 = vmatpush1.bf16.msra.mxu0 0
    %191 = vmatprep.subr.bf16.mxu0 0
    %192 = vmatpush1.bf16.msra.mxu0 0
    %193 = vmatprep.subr.bf16.mxu0 0
    %194 = vmatpush1.bf16.msra.mxu0 0
    %195 = vmatprep.subr.bf16.mxu0 0
    %196 = vmatpush1.bf16.msra.mxu0 0
    %197 = vmatprep.subr.bf16.mxu0 0
    %198 = vmatpush1.bf16.msra.mxu0 0
    %199 = vmatprep.subr.bf16.mxu0 0
    %200 = vmatpush1.bf16.msra.mxu0 0
    %201 = vmatprep.subr.bf16.mxu0 0
    %202 = vmatpush1.bf16.msra.mxu0 0
    %203 = vmatprep.mubr.bf16.mxu0 0
    %204 = vmatmul.mubr.bf16.gmra.mrb[0].mxu0 %v115
    %v205 = vpop.f32.mrb[0].mxu0
    %v206 = vadd.f32 %v88, %v205
    %v207 = vpop.f32.mrb[0].mxu0
    %v208 = vadd.f32 %v92, %v207
    %v209 = vpop.f32.mrb[0].mxu0
    %v210 = vpop.f32.mrb[0].mxu0
    %211 = vdwg.mxu0
    %v212 = vmax.f32 %v165, 0.0
    %v213 = vmax.f32 %v167, 0.0
    %v214 = vmax.f32 %v206, 0.0
    %v215 = vmax.f32 %v208, 0.0
    %v216 = vpack.c.bf16 %v212, %v212
    %v217 = vpack.c.bf16 %v213, %v213
    %v218 = vpack.c.bf16 %v214, %v214
    %v219 = vpack.c.bf16 %v215, %v215
    %v220 = vld [vmem:[#allocation8] sm:$0xff]
    %v221 = vld [vmem:[#allocation8 + $0x8] sm:$0xf]
    %v222 = vld [vmem:[#allocation8 + $0xc] sm:$0xff]
    %v223 = vld [vmem:[#allocation8 + $0x14] sm:$0xf]
    %v224 = vld [vmem:[#allocation8 + $0x18] sm:$0xff]
    %v225 = vld [vmem:[#allocation8 + $0x20] sm:$0xf]
    %v226 = vld [vmem:[#allocation8 + $0x24] sm:$0xff]
    %v227 = vld [vmem:[#allocation8 + $0x2c] sm:$0xf]
    %v228 = vld [vmem:[#allocation8 + $0x30] sm:$0xff]
    %v229 = vld [vmem:[#allocation8 + $0x38] sm:$0xf]
    %v230 = vld [vmem:[#allocation8 + $0x3c] sm:$0xff]
    %v231 = vld [vmem:[#allocation8 + $0x44] sm:$0xf]
    %v232 = vld [vmem:[#allocation8 + $0x48] sm:$0xff]
    %v233 = vld [vmem:[#allocation8 + $0x50] sm:$0xf]
    %v234 = vld [vmem:[#allocation8 + $0x54] sm:$0xff]
    %v235 = vld [vmem:[#allocation8 + $0x5c] sm:$0xf]
    %v236 = vld [vmem:[#allocation8 + $0x60] sm:$0xff]
    %v237 = vld [vmem:[#allocation8 + $0x68] sm:$0xf]
    %v238 = vld [vmem:[#allocation8 + $0x6c] sm:$0xff]
    %v239 = vld [vmem:[#allocation8 + $0x74] sm:$0xf]
    %v240 = vld [vmem:[#allocation8 + $0x78] sm:$0xff]
    %v241 = vld [vmem:[#allocation8 + $0x80] sm:$0xf]
    %v242 = vld [vmem:[#allocation8 + $0x84] sm:$0xff]
    %v243 = vld [vmem:[#allocation8 + $0x8c] sm:$0xf]
    %v244 = vld [vmem:[#allocation8 + $0x90] sm:$0xff]
    %v245 = vld [vmem:[#allocation8 + $0x98] sm:$0xf]
    %v246 = vld [vmem:[#allocation8 + $0x9c] sm:$0xff]
    %v247 = vld [vmem:[#allocation8 + $0xa4] sm:$0xf]
    %v248 = vld [vmem:[#allocation8 + $0xa8] sm:$0xff]
    %v249 = vld [vmem:[#allocation8 + $0xb0] sm:$0xf]
    %v250 = vld [vmem:[#allocation8 + $0xb4] sm:$0xff]
    %v251 = vld [vmem:[#allocation8 + $0xbc] sm:$0xf]
    %v252 = vld [vmem:[#allocation8 + $0xc0] sm:$0xff]
    %v253 = vld [vmem:[#allocation8 + $0xc8] sm:$0xf]
    %v254 = vld [vmem:[#allocation8 + $0xcc] sm:$0xff]
    %v255 = vld [vmem:[#allocation8 + $0xd4] sm:$0xf]
    %v256 = vld [vmem:[#allocation8 + $0xd8] sm:$0xff]
    %v257 = vld [vmem:[#allocation8 + $0xe0] sm:$0xf]
    %v258 = vld [vmem:[#allocation8 + $0xe4] sm:$0xff]
    %v259 = vld [vmem:[#allocation8 + $0xec] sm:$0xf]
    %v260 = vld [vmem:[#allocation8 + $0xf0] sm:$0xff]
    %v261 = vld [vmem:[#allocation8 + $0xf8] sm:$0xf]
    %v262 = vld [vmem:[#allocation8 + $0xfc] sm:$0xff]
    %v263 = vld [vmem:[#allocation8 + $0x104] sm:$0xf]
    %v264 = vld [vmem:[#allocation8 + $0x108] sm:$0xff]
    %v265 = vld [vmem:[#allocation8 + $0x110] sm:$0xf]
    %v266 = vld [vmem:[#allocation8 + $0x114] sm:$0xff]
    %v267 = vld [vmem:[#allocation8 + $0x11c] sm:$0xf]
    %v268 = vld [vmem:[#allocation8 + $0x120] sm:$0xff]
    %v269 = vld [vmem:[#allocation8 + $0x128] sm:$0xf]
    %v270 = vld [vmem:[#allocation8 + $0x12c] sm:$0xff]
    %v271 = vld [vmem:[#allocation8 + $0x134] sm:$0xf]
    %v272 = vld [vmem:[#allocation8 + $0x138] sm:$0xff]
    %v273 = vld [vmem:[#allocation8 + $0x140] sm:$0xf]
    %v274 = vld [vmem:[#allocation8 + $0x144] sm:$0xff]
    %v275 = vld [vmem:[#allocation8 + $0x14c] sm:$0xf]
    %v276 = vld [vmem:[#allocation8 + $0x150] sm:$0xff]
    %v277 = vld [vmem:[#allocation8 + $0x158] sm:$0xf]
    %v278 = vld [vmem:[#allocation8 + $0x15c] sm:$0xff]
    %v279 = vld [vmem:[#allocation8 + $0x164] sm:$0xf]
    %v280 = vld [vmem:[#allocation8 + $0x168] sm:$0xff]
    %v281 = vld [vmem:[#allocation8 + $0x170] sm:$0xf]
    %v282 = vld [vmem:[#allocation8 + $0x174] sm:$0xff]
    %v283 = vld [vmem:[#allocation8 + $0x17c] sm:$0xf]
    %v284 = vld [vmem:[#allocation8 + $0x180] sm:$0xff]
    %v285 = vld [vmem:[#allocation8 + $0x188] sm:$0xf]
    %v286 = vld [vmem:[#allocation8 + $0x18c] sm:$0xff]
    %v287 = vld [vmem:[#allocation8 + $0x194] sm:$0xf]
    %v288 = vld [vmem:[#allocation8 + $0x198] sm:$0xff]
    %v289 = vld [vmem:[#allocation8 + $0x1a0] sm:$0xf]
    %v290 = vld [vmem:[#allocation8 + $0x1a4] sm:$0xff]
    %v291 = vld [vmem:[#allocation8 + $0x1ac] sm:$0xf]
    %v292 = vld [vmem:[#allocation8 + $0x1b0] sm:$0xff]
    %v293 = vld [vmem:[#allocation8 + $0x1b8] sm:$0xf]
    %v294 = vld [vmem:[#allocation8 + $0x1bc] sm:$0xff]
    %v295 = vld [vmem:[#allocation8 + $0x1c4] sm:$0xf]
    %v296 = vld [vmem:[#allocation8 + $0x1c8] sm:$0xff]
    %v297 = vld [vmem:[#allocation8 + $0x1d0] sm:$0xf]
    %v298 = vld [vmem:[#allocation8 + $0x1d4] sm:$0xff]
    %v299 = vld [vmem:[#allocation8 + $0x1dc] sm:$0xf]
    %v300 = vld [vmem:[#allocation8 + $0x1e0] sm:$0xff]
    %v301 = vld [vmem:[#allocation8 + $0x1e8] sm:$0xf]
    %v302 = vld [vmem:[#allocation8 + $0x1ec] sm:$0xff]
    %v303 = vld [vmem:[#allocation8 + $0x1f4] sm:$0xf]
    %v304 = vld [vmem:[#allocation8 + $0x1f8] sm:$0xff]
    %v305 = vld [vmem:[#allocation8 + $0x200] sm:$0xf]
    %v306 = vld [vmem:[#allocation8 + $0x204] sm:$0xff]
    %v307 = vld [vmem:[#allocation8 + $0x20c] sm:$0xf]
    %v308 = vld [vmem:[#allocation8 + $0x210] sm:$0xff]
    %v309 = vld [vmem:[#allocation8 + $0x218] sm:$0xf]
    %v310 = vld [vmem:[#allocation8 + $0x21c] sm:$0xff]
    %v311 = vld [vmem:[#allocation8 + $0x224] sm:$0xf]
    %v312 = vld [vmem:[#allocation8 + $0x228] sm:$0xff]
    %v313 = vld [vmem:[#allocation8 + $0x230] sm:$0xf]
    %v314 = vld [vmem:[#allocation8 + $0x234] sm:$0xff]
    %v315 = vld [vmem:[#allocation8 + $0x23c] sm:$0xf]
    %v316 = vld [vmem:[#allocation8 + $0x240] sm:$0xff]
    %v317 = vld [vmem:[#allocation8 + $0x248] sm:$0xf]
    %v318 = vld [vmem:[#allocation8 + $0x24c] sm:$0xff]
    %v319 = vld [vmem:[#allocation8 + $0x254] sm:$0xf]
    %v320 = vld [vmem:[#allocation8 + $0x258] sm:$0xff]
    %v321 = vld [vmem:[#allocation8 + $0x260] sm:$0xf]
    %v322 = vld [vmem:[#allocation8 + $0x264] sm:$0xff]
    %v323 = vld [vmem:[#allocation8 + $0x26c] sm:$0xf]
    %v324 = vld [vmem:[#allocation8 + $0x270] sm:$0xff]
    %v325 = vld [vmem:[#allocation8 + $0x278] sm:$0xf]
    %v326 = vld [vmem:[#allocation8 + $0x27c] sm:$0xff]
    %v327 = vld [vmem:[#allocation8 + $0x284] sm:$0xf]
    %v328 = vld [vmem:[#allocation8 + $0x288] sm:$0xff]
    %v329 = vld [vmem:[#allocation8 + $0x290] sm:$0xf]
    %v330 = vld [vmem:[#allocation8 + $0x294] sm:$0xff]
    %v331 = vld [vmem:[#allocation8 + $0x29c] sm:$0xf]
    %v332 = vld [vmem:[#allocation8 + $0x2a0] sm:$0xff]
    %v333 = vld [vmem:[#allocation8 + $0x2a8] sm:$0xf]
    %v334 = vld [vmem:[#allocation8 + $0x2ac] sm:$0xff]
    %v335 = vld [vmem:[#allocation8 + $0x2b4] sm:$0xf]
    %v336 = vld [vmem:[#allocation8 + $0x2b8] sm:$0xff]
    %v337 = vld [vmem:[#allocation8 + $0x2c0] sm:$0xf]
    %v338 = vld [vmem:[#allocation8 + $0x2c4] sm:$0xff]
    %v339 = vld [vmem:[#allocation8 + $0x2cc] sm:$0xf]
    %v340 = vld [vmem:[#allocation8 + $0x2d0] sm:$0xff]
    %v341 = vld [vmem:[#allocation8 + $0x2d8] sm:$0xf]
    %v342 = vld [vmem:[#allocation8 + $0x2dc] sm:$0xff]
    %v343 = vld [vmem:[#allocation8 + $0x2e4] sm:$0xf]
    %v344 = vld [vmem:[#allocation8 + $0x2e8] sm:$0xff]
    %v345 = vld [vmem:[#allocation8 + $0x2f0] sm:$0xf]
    %v346 = vld [vmem:[#allocation8 + $0x2f4] sm:$0xff]
    %v347 = vld [vmem:[#allocation8 + $0x2fc] sm:$0xf]
    %v348 = vld [vmem:[%s4] sm:$0x7]
    %v350 = vlaneseq
    %v351 = vshrl.u32 %v350, 7
    %v352 = vsub.s32 0, %v351
    %v353 = vrot.slane %v348, %v352
    %v354 = vlaneseq
    %v355 = vshrl.u32 %v354, 7
    %v356 = vsub.s32 1, %v355
    %v357 = vrot.slane %v348, %v356
    %v358 = vlaneseq
    %v359 = vshrl.u32 %v358, 7
    %v360 = vsub.s32 2, %v359
    %v361 = vrot.slane %v348, %v360
    %v493 = vunpack.c.l.b16 %v220
    %v494 = vunpack.c.h.b16 %v220
    %v495 = vunpack.c.l.b16 %v221
    %v496 = vunpack.c.l.b16 %v222
    %v497 = vunpack.c.h.b16 %v222
    %v498 = vunpack.c.l.b16 %v223
    %v499 = vunpack.c.l.b16 %v224
    %v500 = vunpack.c.h.b16 %v224
    %v501 = vunpack.c.l.b16 %v225
    %v502 = vunpack.c.l.b16 %v226
    %v503 = vunpack.c.h.b16 %v226
    %v504 = vunpack.c.l.b16 %v227
    %v505 = vunpack.c.l.b16 %v228
    %v506 = vunpack.c.h.b16 %v228
    %v507 = vunpack.c.l.b16 %v229
    %v508 = vunpack.c.l.b16 %v230
    %v509 = vunpack.c.h.b16 %v230
    %v510 = vunpack.c.l.b16 %v231
    %v511 = vunpack.c.l.b16 %v232
    %v512 = vunpack.c.h.b16 %v232
    %v513 = vunpack.c.l.b16 %v233
    %v514 = vunpack.c.l.b16 %v234
    %v515 = vunpack.c.h.b16 %v234
    %v516 = vunpack.c.l.b16 %v235
    %v517 = vunpack.c.l.b16 %v236
    %v518 = vunpack.c.h.b16 %v236
    %v519 = vunpack.c.l.b16 %v237
    %v520 = vunpack.c.l.b16 %v238
    %v521 = vunpack.c.h.b16 %v238
    %v522 = vunpack.c.l.b16 %v239
    %v523 = vunpack.c.l.b16 %v240
    %v524 = vunpack.c.h.b16 %v240
    %v525 = vunpack.c.l.b16 %v241
    %v526 = vunpack.c.l.b16 %v242
    %v527 = vunpack.c.h.b16 %v242
    %v528 = vunpack.c.l.b16 %v243
    %v529 = vunpack.c.l.b16 %v244
    %v530 = vunpack.c.h.b16 %v244
    %v531 = vunpack.c.l.b16 %v245
    %v532 = vunpack.c.l.b16 %v246
    %v533 = vunpack.c.h.b16 %v246
    %v534 = vunpack.c.l.b16 %v247
    %v535 = vunpack.c.l.b16 %v248
    %v536 = vunpack.c.h.b16 %v248
    %v537 = vunpack.c.l.b16 %v249
    %v538 = vunpack.c.l.b16 %v250
    %v539 = vunpack.c.h.b16 %v250
    %v540 = vunpack.c.l.b16 %v251
    %v541 = vunpack.c.l.b16 %v252
    %v542 = vunpack.c.h.b16 %v252
    %v543 = vunpack.c.l.b16 %v253
    %v544 = vunpack.c.l.b16 %v254
    %v545 = vunpack.c.h.b16 %v254
    %v546 = vunpack.c.l.b16 %v255
    %v547 = vunpack.c.l.b16 %v256
    %v548 = vunpack.c.h.b16 %v256
    %v549 = vunpack.c.l.b16 %v257
    %v550 = vunpack.c.l.b16 %v258
    %v551 = vunpack.c.h.b16 %v258
    %v552 = vunpack.c.l.b16 %v259
    %v553 = vunpack.c.l.b16 %v260
    %v554 = vunpack.c.h.b16 %v260
    %v555 = vunpack.c.l.b16 %v261
    %v556 = vunpack.c.l.b16 %v262
    %v557 = vunpack.c.h.b16 %v262
    %v558 = vunpack.c.l.b16 %v263
    %v559 = vunpack.c.l.b16 %v264
    %v560 = vunpack.c.h.b16 %v264
    %v561 = vunpack.c.l.b16 %v265
    %v562 = vunpack.c.l.b16 %v266
    %v563 = vunpack.c.h.b16 %v266
    %v564 = vunpack.c.l.b16 %v267
    %v565 = vunpack.c.l.b16 %v268
    %v566 = vunpack.c.h.b16 %v268
    %v567 = vunpack.c.l.b16 %v269
    %v568 = vunpack.c.l.b16 %v270
    %v569 = vunpack.c.h.b16 %v270
    %v570 = vunpack.c.l.b16 %v271
    %v571 = vunpack.c.l.b16 %v272
    %v572 = vunpack.c.h.b16 %v272
    %v573 = vunpack.c.l.b16 %v273
    %v574 = vunpack.c.l.b16 %v274
    %v575 = vunpack.c.h.b16 %v274
    %v576 = vunpack.c.l.b16 %v275
    %v577 = vunpack.c.l.b16 %v276
    %v578 = vunpack.c.h.b16 %v276
    %v579 = vunpack.c.l.b16 %v277
    %v580 = vunpack.c.l.b16 %v278
    %v581 = vunpack.c.h.b16 %v278
    %v582 = vunpack.c.l.b16 %v279
    %v583 = vunpack.c.l.b16 %v280
    %v584 = vunpack.c.h.b16 %v280
    %v585 = vunpack.c.l.b16 %v281
    %v586 = vunpack.c.l.b16 %v282
    %v587 = vunpack.c.h.b16 %v282
    %v588 = vunpack.c.l.b16 %v283
    %v589 = vunpack.c.l.b16 %v284
    %v590 = vunpack.c.h.b16 %v284
    %v591 = vunpack.c.l.b16 %v285
    %v592 = vunpack.c.l.b16 %v286
    %v593 = vunpack.c.h.b16 %v286
    %v594 = vunpack.c.l.b16 %v287
    %v595 = vunpack.c.l.b16 %v288
    %v596 = vunpack.c.h.b16 %v288
    %v597 = vunpack.c.l.b16 %v289
    %v598 = vunpack.c.l.b16 %v290
    %v599 = vunpack.c.h.b16 %v290
    %v600 = vunpack.c.l.b16 %v291
    %v601 = vunpack.c.l.b16 %v292
    %v602 = vunpack.c.h.b16 %v292
    %v603 = vunpack.c.l.b16 %v293
    %v604 = vunpack.c.l.b16 %v294
    %v605 = vunpack.c.h.b16 %v294
    %v606 = vunpack.c.l.b16 %v295
    %v607 = vunpack.c.l.b16 %v296
    %v608 = vunpack.c.h.b16 %v296
    %v609 = vunpack.c.l.b16 %v297
    %v610 = vunpack.c.l.b16 %v298
    %v611 = vunpack.c.h.b16 %v298
    %v612 = vunpack.c.l.b16 %v299
    %v613 = vunpack.c.l.b16 %v300
    %v614 = vunpack.c.h.b16 %v300
    %v615 = vunpack.c.l.b16 %v301
    %v616 = vunpack.c.l.b16 %v302
    %v617 = vunpack.c.h.b16 %v302
    %v618 = vunpack.c.l.b16 %v303
    %v619 = vunpack.c.l.b16 %v304
    %v620 = vunpack.c.h.b16 %v304
    %v621 = vunpack.c.l.b16 %v305
    %v622 = vunpack.c.l.b16 %v306
    %v623 = vunpack.c.h.b16 %v306
    %v624 = vunpack.c.l.b16 %v307
    %v625 = vunpack.c.l.b16 %v308
    %v626 = vunpack.c.h.b16 %v308
    %v627 = vunpack.c.l.b16 %v309
    %v628 = vunpack.c.l.b16 %v310
    %v629 = vunpack.c.h.b16 %v310
    %v630 = vunpack.c.l.b16 %v311
    %v631 = vunpack.c.l.b16 %v312
    %v632 = vunpack.c.h.b16 %v312
    %v633 = vunpack.c.l.b16 %v313
    %v634 = vunpack.c.l.b16 %v314
    %v635 = vunpack.c.h.b16 %v314
    %v636 = vunpack.c.l.b16 %v315
    %v637 = vunpack.c.l.b16 %v316
    %v638 = vunpack.c.h.b16 %v316
    %v639 = vunpack.c.l.b16 %v317
    %v640 = vunpack.c.l.b16 %v318
    %v641 = vunpack.c.h.b16 %v318
    %v642 = vunpack.c.l.b16 %v319
    %v643 = vunpack.c.l.b16 %v320
    %v644 = vunpack.c.h.b16 %v320
    %v645 = vunpack.c.l.b16 %v321
    %v646 = vunpack.c.l.b16 %v322
    %v647 = vunpack.c.h.b16 %v322
    %v648 = vunpack.c.l.b16 %v323
    %v649 = vunpack.c.l.b16 %v324
    %v650 = vunpack.c.h.b16 %v324
    %v651 = vunpack.c.l.b16 %v325
    %v652 = vunpack.c.l.b16 %v326
    %v653 = vunpack.c.h.b16 %v326
    %v654 = vunpack.c.l.b16 %v327
    %v655 = vunpack.c.l.b16 %v328
    %v656 = vunpack.c.h.b16 %v328
    %v657 = vunpack.c.l.b16 %v329
    %v658 = vunpack.c.l.b16 %v330
    %v659 = vunpack.c.h.b16 %v330
    %v660 = vunpack.c.l.b16 %v331
    %v661 = vunpack.c.l.b16 %v332
    %v662 = vunpack.c.h.b16 %v332
    %v663 = vunpack.c.l.b16 %v333
    %v664 = vunpack.c.l.b16 %v334
    %v665 = vunpack.c.h.b16 %v334
    %v666 = vunpack.c.l.b16 %v335
    %v667 = vunpack.c.l.b16 %v336
    %v668 = vunpack.c.h.b16 %v336
    %v669 = vunpack.c.l.b16 %v337
    %v670 = vunpack.c.l.b16 %v338
    %v671 = vunpack.c.h.b16 %v338
    %v672 = vunpack.c.l.b16 %v339
    %v673 = vunpack.c.l.b16 %v340
    %v674 = vunpack.c.h.b16 %v340
    %v675 = vunpack.c.l.b16 %v341
    %v676 = vunpack.c.l.b16 %v342
    %v677 = vunpack.c.h.b16 %v342
    %v678 = vunpack.c.l.b16 %v343
    %v679 = vunpack.c.l.b16 %v344
    %v680 = vunpack.c.h.b16 %v344
    %v681 = vunpack.c.l.b16 %v345
    %v682 = vunpack.c.l.b16 %v346
    %v683 = vunpack.c.h.b16 %v346
    %v684 = vunpack.c.l.b16 %v347
    %v685 = vpack.c.b16 %v496, %v493
    %v686 = vpack.c.b16 %v497, %v494
    %v687 = vpack.c.b16 %v498, %v495
    %v688 = vpack.c.b16 %v502, %v499
    %v689 = vpack.c.b16 %v503, %v500
    %v690 = vpack.c.b16 %v504, %v501
    %v691 = vpack.c.b16 %v508, %v505
    %v692 = vpack.c.b16 %v509, %v506
    %v693 = vpack.c.b16 %v510, %v507
    %v694 = vpack.c.b16 %v514, %v511
    %v695 = vpack.c.b16 %v515, %v512
    %v696 = vpack.c.b16 %v516, %v513
    %v697 = vpack.c.b16 %v520, %v517
    %v698 = vpack.c.b16 %v521, %v518
    %v699 = vpack.c.b16 %v522, %v519
    %v700 = vpack.c.b16 %v526, %v523
    %v701 = vpack.c.b16 %v527, %v524
    %v702 = vpack.c.b16 %v528, %v525
    %v703 = vpack.c.b16 %v532, %v529
    %v704 = vpack.c.b16 %v533, %v530
    %v705 = vpack.c.b16 %v534, %v531
    %v706 = vpack.c.b16 %v538, %v535
    %v707 = vpack.c.b16 %v539, %v536
    %v708 = vpack.c.b16 %v540, %v537
    %v709 = vpack.c.b16 %v544, %v541
    %v710 = vpack.c.b16 %v545, %v542
    %v711 = vpack.c.b16 %v546, %v543
    %v712 = vpack.c.b16 %v550, %v547
    %v713 = vpack.c.b16 %v551, %v548
    %v714 = vpack.c.b16 %v552, %v549
    %v715 = vpack.c.b16 %v556, %v553
    %v716 = vpack.c.b16 %v557, %v554
    %v717 = vpack.c.b16 %v558, %v555
    %v718 = vpack.c.b16 %v562, %v559
    %v719 = vpack.c.b16 %v563, %v560
    %v720 = vpack.c.b16 %v564, %v561
    %v721 = vpack.c.b16 %v568, %v565
    %v722 = vpack.c.b16 %v569, %v566
    %v723 = vpack.c.b16 %v570, %v567
    %v724 = vpack.c.b16 %v574, %v571
    %v725 = vpack.c.b16 %v575, %v572
    %v726 = vpack.c.b16 %v576, %v573
    %v727 = vpack.c.b16 %v580, %v577
    %v728 = vpack.c.b16 %v581, %v578
    %v729 = vpack.c.b16 %v582, %v579
    %v730 = vpack.c.b16 %v586, %v583
    %v731 = vpack.c.b16 %v587, %v584
    %v732 = vpack.c.b16 %v588, %v585
    %v733 = vpack.c.b16 %v592, %v589
    %v734 = vpack.c.b16 %v593, %v590
    %v735 = vpack.c.b16 %v594, %v591
    %v736 = vpack.c.b16 %v598, %v595
    %v737 = vpack.c.b16 %v599, %v596
    %v738 = vpack.c.b16 %v600, %v597
    %v739 = vpack.c.b16 %v604, %v601
    %v740 = vpack.c.b16 %v605, %v602
    %v741 = vpack.c.b16 %v606, %v603
    %v742 = vpack.c.b16 %v610, %v607
    %v743 = vpack.c.b16 %v611, %v608
    %v744 = vpack.c.b16 %v612, %v609
    %v745 = vpack.c.b16 %v616, %v613
    %v746 = vpack.c.b16 %v617, %v614
    %v747 = vpack.c.b16 %v618, %v615
    %v748 = vpack.c.b16 %v622, %v619
    %v749 = vpack.c.b16 %v623, %v620
    %v750 = vpack.c.b16 %v624, %v621
    %v751 = vpack.c.b16 %v628, %v625
    %v752 = vpack.c.b16 %v629, %v626
    %v753 = vpack.c.b16 %v630, %v627
    %v754 = vpack.c.b16 %v634, %v631
    %v755 = vpack.c.b16 %v635, %v632
    %v756 = vpack.c.b16 %v636, %v633
    %v757 = vpack.c.b16 %v640, %v637
    %v758 = vpack.c.b16 %v641, %v638
    %v759 = vpack.c.b16 %v642, %v639
    %v760 = vpack.c.b16 %v646, %v643
    %v761 = vpack.c.b16 %v647, %v644
    %v762 = vpack.c.b16 %v648, %v645
    %v763 = vpack.c.b16 %v652, %v649
    %v764 = vpack.c.b16 %v653, %v650
    %v765 = vpack.c.b16 %v654, %v651
    %v766 = vpack.c.b16 %v658, %v655
    %v767 = vpack.c.b16 %v659, %v656
    %v768 = vpack.c.b16 %v660, %v657
    %v769 = vpack.c.b16 %v664, %v661
    %v770 = vpack.c.b16 %v665, %v662
    %v771 = vpack.c.b16 %v666, %v663
    %v772 = vpack.c.b16 %v670, %v667
    %v773 = vpack.c.b16 %v671, %v668
    %v774 = vpack.c.b16 %v672, %v669
    %v775 = vpack.c.b16 %v676, %v673
    %v776 = vpack.c.b16 %v677, %v674
    %v777 = vpack.c.b16 %v678, %v675
    %v778 = vpack.c.b16 %v682, %v679
    %v779 = vpack.c.b16 %v683, %v680
    %v780 = vpack.c.b16 %v684, %v681
    %877 = vmatprep.subr.bf16.mxu0 %v686
    %878 = vmatpush1.bf16.msra.mxu0 %v685
    %879 = vmatprep.subr.bf16.mxu0 %v689
    %880 = vmatpush1.bf16.msra.mxu0 %v688
    %881 = vmatprep.subr.bf16.mxu0 %v692
    %882 = vmatpush1.bf16.msra.mxu0 %v691
    %883 = vmatprep.subr.bf16.mxu0 %v695
    %884 = vmatpush1.bf16.msra.mxu0 %v694
    %885 = vmatprep.subr.bf16.mxu0 %v698
    %886 = vmatpush1.bf16.msra.mxu0 %v697
    %887 = vmatprep.subr.bf16.mxu0 %v701
    %888 = vmatpush1.bf16.msra.mxu0 %v700
    %889 = vmatprep.subr.bf16.mxu0 %v704
    %890 = vmatpush1.bf16.msra.mxu0 %v703
    %891 = vmatprep.subr.bf16.mxu0 %v707
    %892 = vmatpush1.bf16.msra.mxu0 %v706
    %893 = vmatprep.subr.bf16.mxu0 %v710
    %894 = vmatpush1.bf16.msra.mxu0 %v709
    %895 = vmatprep.subr.bf16.mxu0 %v713
    %896 = vmatpush1.bf16.msra.mxu0 %v712
    %897 = vmatprep.subr.bf16.mxu0 %v716
    %898 = vmatpush1.bf16.msra.mxu0 %v715
    %899 = vmatprep.subr.bf16.mxu0 %v719
    %900 = vmatpush1.bf16.msra.mxu0 %v718
    %901 = vmatprep.subr.bf16.mxu0 %v722
    %902 = vmatpush1.bf16.msra.mxu0 %v721
    %903 = vmatprep.subr.bf16.mxu0 %v725
    %904 = vmatpush1.bf16.msra.mxu0 %v724
    %905 = vmatprep.subr.bf16.mxu0 %v728
    %906 = vmatpush1.bf16.msra.mxu0 %v727
    %907 = vmatprep.subr.bf16.mxu0 %v731
    %908 = vmatpush1.bf16.msra.mxu0 %v730
    %909 = vmatprep.mubr.bf16.mxu0 %v217
    %910 = vmatmul.mubr.bf16.gmra.mrb[0].mxu0 %v216
    %v911 = vpop.f32.mrb[0].mxu0
    %v912 = vadd.f32 %v353, %v911
    %v913 = vpop.f32.mrb[0].mxu0
    %v914 = vadd.f32 %v357, %v913
    %v915 = vpop.f32.mrb[0].mxu0
    %v916 = vpop.f32.mrb[0].mxu0
    %917 = vdwg.mxu0
    %918 = vmatprep.subr.bf16.mxu0 %v734
    %919 = vmatpush1.bf16.msra.mxu0 %v733
    %920 = vmatprep.subr.bf16.mxu0 %v737
    %921 = vmatpush1.bf16.msra.mxu0 %v736
    %922 = vmatprep.subr.bf16.mxu0 %v740
    %923 = vmatpush1.bf16.msra.mxu0 %v739
    %924 = vmatprep.subr.bf16.mxu0 %v743
    %925 = vmatpush1.bf16.msra.mxu0 %v742
    %926 = vmatprep.subr.bf16.mxu0 %v746
    %927 = vmatpush1.bf16.msra.mxu0 %v745
    %928 = vmatprep.subr.bf16.mxu0 %v749
    %929 = vmatpush1.bf16.msra.mxu0 %v748
    %930 = vmatprep.subr.bf16.mxu0 %v752
    %931 = vmatpush1.bf16.msra.mxu0 %v751
    %932 = vmatprep.subr.bf16.mxu0 %v755
    %933 = vmatpush1.bf16.msra.mxu0 %v754
    %934 = vmatprep.subr.bf16.mxu0 %v758
    %935 = vmatpush1.bf16.msra.mxu0 %v757
    %936 = vmatprep.subr.bf16.mxu0 %v761
    %937 = vmatpush1.bf16.msra.mxu0 %v760
    %938 = vmatprep.subr.bf16.mxu0 %v764
    %939 = vmatpush1.bf16.msra.mxu0 %v763
    %940 = vmatprep.subr.bf16.mxu0 %v767
    %941 = vmatpush1.bf16.msra.mxu0 %v766
    %942 = vmatprep.subr.bf16.mxu0 %v770
    %943 = vmatpush1.bf16.msra.mxu0 %v769
    %944 = vmatprep.subr.bf16.mxu0 %v773
    %945 = vmatpush1.bf16.msra.mxu0 %v772
    %946 = vmatprep.subr.bf16.mxu0 %v776
    %947 = vmatpush1.bf16.msra.mxu0 %v775
    %948 = vmatprep.subr.bf16.mxu0 %v779
    %949 = vmatpush1.bf16.msra.mxu0 %v778
    %950 = vmatprep.mubr.bf16.mxu0 %v219
    %951 = vmatmul.mubr.bf16.gmra.mrb[0].mxu0 %v218
    %v952 = vpop.f32.mrb[0].mxu0
    %v953 = vadd.f32 %v912, %v952
    %v954 = vpop.f32.mrb[0].mxu0
    %v955 = vadd.f32 %v914, %v954
    %v956 = vpop.f32.mrb[0].mxu0
    %v957 = vpop.f32.mrb[0].mxu0
    %958 = vdwg.mxu0
    %959 = vmatprep.subr.bf16.mxu0 0
    %960 = vmatpush1.bf16.msra.mxu0 %v687
    %961 = vmatprep.subr.bf16.mxu0 0
    %962 = vmatpush1.bf16.msra.mxu0 %v690
    %963 = vmatprep.subr.bf16.mxu0 0
    %964 = vmatpush1.bf16.msra.mxu0 %v693
    %965 = vmatprep.subr.bf16.mxu0 0
    %966 = vmatpush1.bf16.msra.mxu0 %v696
    %967 = vmatprep.subr.bf16.mxu0 0
    %968 = vmatpush1.bf16.msra.mxu0 %v699
    %969 = vmatprep.subr.bf16.mxu0 0
    %970 = vmatpush1.bf16.msra.mxu0 %v702
    %971 = vmatprep.subr.bf16.mxu0 0
    %972 = vmatpush1.bf16.msra.mxu0 %v705
    %973 = vmatprep.subr.bf16.mxu0 0
    %974 = vmatpush1.bf16.msra.mxu0 %v708
    %975 = vmatprep.subr.bf16.mxu0 0
    %976 = vmatpush1.bf16.msra.mxu0 %v711
    %977 = vmatprep.subr.bf16.mxu0 0
    %978 = vmatpush1.bf16.msra.mxu0 %v714
    %979 = vmatprep.subr.bf16.mxu0 0
    %980 = vmatpush1.bf16.msra.mxu0 %v717
    %981 = vmatprep.subr.bf16.mxu0 0
    %982 = vmatpush1.bf16.msra.mxu0 %v720
    %983 = vmatprep.subr.bf16.mxu0 0
    %984 = vmatpush1.bf16.msra.mxu0 %v723
    %985 = vmatprep.subr.bf16.mxu0 0
    %986 = vmatpush1.bf16.msra.mxu0 %v726
    %987 = vmatprep.subr.bf16.mxu0 0
    %988 = vmatpush1.bf16.msra.mxu0 %v729
    %989 = vmatprep.subr.bf16.mxu0 0
    %990 = vmatpush1.bf16.msra.mxu0 %v732
    %991 = vmatprep.mubr.bf16.mxu0 %v217
    %992 = vmatmul.mubr.bf16.gmra.mrb[0].mxu0 %v216
    %v993 = vpop.f32.mrb[0].mxu0
    %v994 = vadd.f32 %v361, %v993
    %v995 = vpop.f32.mrb[0].mxu0
    %v996 = vpop.f32.mrb[0].mxu0
    %v997 = vpop.f32.mrb[0].mxu0
    %998 = vdwg.mxu0
    %999 = vmatprep.subr.bf16.mxu0 0
    %1000 = vmatpush1.bf16.msra.mxu0 %v735
    %1001 = vmatprep.subr.bf16.mxu0 0
    %1002 = vmatpush1.bf16.msra.mxu0 %v738
    %1003 = vmatprep.subr.bf16.mxu0 0
    %1004 = vmatpush1.bf16.msra.mxu0 %v741
    %1005 = vmatprep.subr.bf16.mxu0 0
    %1006 = vmatpush1.bf16.msra.mxu0 %v744
    %1007 = vmatprep.subr.bf16.mxu0 0
    %1008 = vmatpush1.bf16.msra.mxu0 %v747
    %1009 = vmatprep.subr.bf16.mxu0 0
    %1010 = vmatpush1.bf16.msra.mxu0 %v750
    %1011 = vmatprep.subr.bf16.mxu0 0
    %1012 = vmatpush1.bf16.msra.mxu0 %v753
    %1013 = vmatprep.subr.bf16.mxu0 0
    %1014 = vmatpush1.bf16.msra.mxu0 %v756
    %1015 = vmatprep.subr.bf16.mxu0 0
    %1016 = vmatpush1.bf16.msra.mxu0 %v759
    %1017 = vmatprep.subr.bf16.mxu0 0
    %1018 = vmatpush1.bf16.msra.mxu0 %v762
    %1019 = vmatprep.subr.bf16.mxu0 0
    %1020 = vmatpush1.bf16.msra.mxu0 %v765
    %1021 = vmatprep.subr.bf16.mxu0 0
    %1022 = vmatpush1.bf16.msra.mxu0 %v768
    %1023 = vmatprep.subr.bf16.mxu0 0
    %1024 = vmatpush1.bf16.msra.mxu0 %v771
    %1025 = vmatprep.subr.bf16.mxu0 0
    %1026 = vmatpush1.bf16.msra.mxu0 %v774
    %1027 = vmatprep.subr.bf16.mxu0 0
    %1028 = vmatpush1.bf16.msra.mxu0 %v777
    %1029 = vmatprep.subr.bf16.mxu0 0
    %1030 = vmatpush1.bf16.msra.mxu0 %v780
    %1031 = vmatprep.mubr.bf16.mxu0 %v219
    %1032 = vmatmul.mubr.bf16.gmra.mrb[0].mxu0 %v218
    %v1033 = vpop.f32.mrb[0].mxu0
    %v1034 = vadd.f32 %v994, %v1033
    %v1035 = vpop.f32.mrb[0].mxu0
    %v1036 = vpop.f32.mrb[0].mxu0
    %v1037 = vpop.f32.mrb[0].mxu0
    %1038 = vdwg.mxu0
    %v1039 = vmax.f32 %v953, 0.0
    %v1040 = vmax.f32 %v955, 0.0
    %v1041 = vmax.f32 %v1034, 0.0
    %v1042 = vld [vmem:[%s5] sm:$0x7]
    %v1044 = vlaneseq
    %v1045 = vshrl.u32 %v1044, 7
    %v1046 = vsub.s32 0, %v1045
    %v1047 = vrot.slane %v1042, %v1046
    %v1048 = vlaneseq
    %v1049 = vshrl.u32 %v1048, 7
    %v1050 = vsub.s32 1, %v1049
    %v1051 = vrot.slane %v1042, %v1050
    %v1052 = vlaneseq
    %v1053 = vshrl.u32 %v1052, 7
    %v1054 = vsub.s32 2, %v1053
    %v1055 = vrot.slane %v1042, %v1054
    %v1059 = vmul.f32 %v1039, %v1047
    %v1060 = vmul.f32 %v1040, %v1051
    %v1061 = vmul.f32 %v1041, %v1055
    %v1062 = vadd.f32 %v1059, %v1060
    %v1063 = vadd.f32 %v1062, %v1061
    %1064 = vadd.xlane.f32.xlu0 %v1063
    %v1065 = vpop.xlane.xlu0 %1064
    %v1066 = vld [vmem:[#allocation2] sm:$0x1]
    %1068 = vset.pattern.permute.xlu0 0
    %1069 = vperm.xlu0 %1068, %v1066
    %v1070 = vpop.permute.xlu0 %1069
    %v1072 = vlaneseq
    %v1073 = vshrl.u32 %v1072, 7
    %v1074 = vsub.s32 0, %v1073
    %v1075 = vrot.slane %v1070, %v1074
    %v1076 = vadd.f32 %v1065, %v1075
    %v1078 = vlaneseq
    %v1079 = vand.u32 %v1078, 127
    %v1080 = vlaneseq
    %v1081 = vshrl.u32 %v1080, 7
    %v1082 = vsub.s32 %v1079, %v1081
    %v1083 = vrot.slane %v1076, %v1082
    %vm1085 = vcmask 57344
    %1086 = vst.msk [vmem:[#allocation9] sm:$0x1] %vm1085, %v1083
    // Predicated region
    $region42: #{tpu_custom_call.1} parent=1 // pred_check
      _
    $region43: #{tpu_custom_call.1} parent=1 // pred_check_branch
      %1088 = sbr.rel (0) target = $region45
    $region44: #{tpu_custom_call.1} parent=1 // pred_region
      %s1090 = ssub.s32 16, 16
      %1091 = vsyncadd [#allocation5], %s1090
      %s1093 = sshll.u32 [#allocation9], 4
      %s1094 = int_to_ptr.vmem [resolvable:$true] %s1093
      %1096 = dma.vmem_to_hbm [thread:$0]  %s1094, 16, %s7, [#allocation5]
    $region45: #{tpu_custom_call.1} parent=1 // pred_fallthru
      _
    // Predicated region
    $region46: #{tpu_custom_call.1} parent=1 // pred_check
      _
    $region47: #{tpu_custom_call.1} parent=1 // pred_check_branch
      %1098 = sbr.rel (0) target = $region49
    $region48: #{tpu_custom_call.1} parent=1 // pred_region
      %1099 = dma.done [#allocation5], 16
    $region49: #{tpu_custom_call.1} parent=1 // pred_fallthru
      _
    %1100 = vsyncpa [#allocation4], 1
    %1101 = vsyncpa [#allocation7], 1
    %1102 = vsyncpa [#allocation5], 1

// kernel: tpu_custom_call.1
$region0: #{tpu_custom_call.1}
  #allocation0 [shape = 'u32[]', space=smem, size = 0x4, offset = 0x4, fixed_abs, tag = 'smem constant byte address 0x4 - core index']
  #allocation1 [shape = 'u32[144,128]{1,0:T(1,128)}', space=vmem, size = 0x12000, scoped, tag = 'internal scratch']
  #allocation2 [shape = 'f32[1,1]{1,0:T(1,128)S(1)}', space=vmem, size = 0x200, scoped, tag = 'scoped memory for tpu_custom_call.1']
  %s0 = inlined_call_operand.hbm [shape: f32[8,12], index: 0, kind: input, shape index: {}]
  %s1 = inlined_call_operand.hbm [shape: bf16[12,512], index: 1, kind: input, shape index: {}]
  %s2 = inlined_call_operand.vmem [shape: f32[1,512], index: 2, kind: input, shape index: {}]
  %s3 = inlined_call_operand.hbm [shape: bf16[512,384], index: 3, kind: input, shape index: {}]
  %s4 = inlined_call_operand.vmem [shape: f32[1,384], index: 4, kind: input, shape index: {}]
  %s5 = inlined_call_operand.vmem [shape: f32[1,384], index: 5, kind: input, shape index: {}]
  %s6 = inlined_call_operand.<no memory space> [shape: f32[1,1], index: 6, kind: input, shape index: {}]
  %s7 = inlined_call_operand.vmem [shape: f32[8,1], index: 7, kind: output, shape index: {}]
  %s8 = sld [smem:[#allocation0]]
  $region50: #{tpu_custom_call.1} parent=0
    _
  %s10 = ssub.s32 1, %s8
  %s11 = scalar_select 0, %s10, %s8
  %v12 = vstv %s6
  %13 = vst [vmem:[#allocation2] sm:$0x1] %v12
  $region1: #{tpu_custom_call.1} parent=0
    #allocation3 [shape = 'u8[4096]{0}', space=vmem, size = 0x1000, scoped, tag = 'input window, operand 0, single buffered']
    #allocation4 [shape = 's32[1]{0}', space=sflag, size = 0x4, scoped, tag = 'scoped memory for tpu_custom_call.1']
    #allocation5 [shape = 'u8[16384]{0}', space=vmem, size = 0x4000, scoped, tag = 'input window, operand 1, single buffered']
    #allocation6 [shape = 's32[1]{0}', space=sflag, size = 0x4, scoped, tag = 'scoped memory for tpu_custom_call.1']
    #allocation7 [shape = 'u8[393216]{0}', space=vmem, size = 0x60000, scoped, tag = 'input window, operand 3, single buffered']
    %14 = vsyncpa [#allocation4], 0
    %15 = vsyncpa [#allocation6], 0
    // Predicated region
    $region2: #{tpu_custom_call.1} parent=1 // pred_check
      _
    $region3: #{tpu_custom_call.1} parent=1 // pred_check_branch
      %17 = sbr.rel (0) target = $region5
    $region4: #{tpu_custom_call.1} parent=1 // pred_region
      %s19 = ssub.s32 128, 128
      %20 = vsyncadd [#allocation4], %s19
      %s22 = sshll.u32 [#allocation3], 4
      %s23 = int_to_ptr.vmem [resolvable:$true] %s22
      %25 = dma.hbm_to_vmem [thread:$0]  %s0, 128, %s23, [#allocation4]
    $region5: #{tpu_custom_call.1} parent=1 // pred_fallthru
      _
    // Predicated region
    $region6: #{tpu_custom_call.1} parent=1 // pred_check
      _
    $region7: #{tpu_custom_call.1} parent=1 // pred_check_branch
      %27 = sbr.rel (0) target = $region9
    $region8: #{tpu_custom_call.1} parent=1 // pred_region
      %s29 = ssub.s32 512, 512
      %30 = vsyncadd [#allocation6], %s29
      %s31 = sshll.u32 [#allocation5], 4
      %s32 = int_to_ptr.vmem [resolvable:$true] %s31
      %37 = dma.hbm_to_vmem [thread:$0]  %s1, 512, %s32, [#allocation6], 256, 256, 16
    $region9: #{tpu_custom_call.1} parent=1 // pred_fallthru
      _
    // Predicated region
    $region10: #{tpu_custom_call.1} parent=1 // pred_check
      _
    $region11: #{tpu_custom_call.1} parent=1 // pred_check_branch
      %39 = sbr.rel (0) target = $region13
    $region12: #{tpu_custom_call.1} parent=1 // pred_region
      _
    $region13: #{tpu_custom_call.1} parent=1 // pred_fallthru
      _
    // Predicated region
    $region14: #{tpu_custom_call.1} parent=1 // pred_check
      _
    $region15: #{tpu_custom_call.1} parent=1 // pred_check_branch
      %41 = sbr.rel (0) target = $region17
    $region16: #{tpu_custom_call.1} parent=1 // pred_region
      %s43 = ssub.s32 12288, 12288
      %44 = vsyncadd [#allocation6], %s43
      %s45 = sshll.u32 [#allocation7], 4
      %s46 = int_to_ptr.vmem [resolvable:$true] %s45
      %51 = dma.hbm_to_vmem [thread:$0]  %s3, 12288, %s46, [#allocation6], 192, 192, 12
    $region17: #{tpu_custom_call.1} parent=1 // pred_fallthru
      _
    // Predicated region
    $region18: #{tpu_custom_call.1} parent=1 // pred_check
      _
    $region19: #{tpu_custom_call.1} parent=1 // pred_check_branch
      %53 = sbr.rel (0) target = $region21
    $region20: #{tpu_custom_call.1} parent=1 // pred_region
      _
    $region21: #{tpu_custom_call.1} parent=1 // pred_fallthru
      _
    // Predicated region
    $region22: #{tpu_custom_call.1} parent=1 // pred_check
      _
    $region23: #{tpu_custom_call.1} parent=1 // pred_check_branch
      %55 = sbr.rel (0) target = $region25
    $region24: #{tpu_custom_call.1} parent=1 // pred_region
      _
    $region25: #{tpu_custom_call.1} parent=1 // pred_fallthru
      _
    // Predicated region
    $region26: #{tpu_custom_call.1} parent=1 // pred_check
      _
    $region27: #{tpu_custom_call.1} parent=1 // pred_check_branch
      %57 = sbr.rel (0) target = $region29
    $region28: #{tpu_custom_call.1} parent=1 // pred_region
      _
    $region29: #{tpu_custom_call.1} parent=1 // pred_fallthru
      _
    // Predicated region
    $region30: #{tpu_custom_call.1} parent=1 // pred_check
      _
    $region31: #{tpu_custom_call.1} parent=1 // pred_check_branch
      %59 = sbr.rel (0) target = $region33
    $region32: #{tpu_custom_call.1} parent=1 // pred_region
      %60 = dma.done [#allocation4], 128
    $region33: #{tpu_custom_call.1} parent=1 // pred_fallthru
      _
    // Predicated region
    $region34: #{tpu_custom_call.1} parent=1 // pred_check
      _
    $region35: #{tpu_custom_call.1} parent=1 // pred_check_branch
      %62 = sbr.rel (0) target = $region37
    $region36: #{tpu_custom_call.1} parent=1 // pred_region
      %63 = dma.done [#allocation6], 512
    $region37: #{tpu_custom_call.1} parent=1 // pred_fallthru
      _
    // Predicated region
    $region38: #{tpu_custom_call.1} parent=1 // pred_check
      _
    $region39: #{tpu_custom_call.1} parent=1 // pred_check_branch
      %65 = sbr.rel (0) target = $region41
    $region40: #{tpu_custom_call.1} parent=1 // pred_region
      %66 = dma.done [#allocation6], 12288
    $region41: #{tpu_custom_call.1} parent=1 // pred_fallthru
      _
    %v68 = vld [vmem:[#allocation3] sm:$0xff]
    %v69 = vpack.c.bf16 %v68, %v68
    %v70 = vld [vmem:[#allocation5] sm:$0xff]
    %v71 = vld [vmem:[#allocation5 + $0x8] sm:$0xff]
    %v72 = vld [vmem:[#allocation5 + $0x10] sm:$0x33]
    %v73 = vld [vmem:[#allocation5 + $0x18] sm:$0x33]
    %v74 = vld [vmem:[%s2] sm:$0xf]
    %v76 = vlaneseq
    %v77 = vshrl.u32 %v76, 7
    %v78 = vsub.s32 0, %v77
    %v79 = vrot.slane %v74, %v78
    %v80 = vlaneseq
    %v81 = vshrl.u32 %v80, 7
    %v82 = vsub.s32 1, %v81
    %v83 = vrot.slane %v74, %v82
    %v84 = vlaneseq
    %v85 = vshrl.u32 %v84, 7
    %v86 = vsub.s32 2, %v85
    %v87 = vrot.slane %v74, %v86
    %v88 = vlaneseq
    %v89 = vshrl.u32 %v88, 7
    %v90 = vsub.s32 3, %v89
    %v91 = vrot.slane %v74, %v90
    %v100 = vunpack.c.l.b16 %v70
    %v101 = vunpack.c.h.b16 %v70
    %v102 = vunpack.c.l.b16 %v71
    %v103 = vunpack.c.h.b16 %v71
    %v104 = vunpack.c.l.b16 %v72
    %v105 = vunpack.c.h.b16 %v72
    %v106 = vunpack.c.l.b16 %v73
    %v107 = vunpack.c.h.b16 %v73
    %v108 = vpack.c.b16 %v104, %v100
    %v109 = vpack.c.b16 %v105, %v101
    %v110 = vpack.c.b16 %v106, %v102
    %v111 = vpack.c.b16 %v107, %v103
    %vm112 = vcmask 97280
    %v114 = vsel %vm112, %v69, 0
    %vm116 = vcmask 1045504
    %v118 = vsel %vm116, %v108, 0
    %v121 = vsel %vm116, %v109, 0
    %v124 = vsel %vm116, %v110, 0
    %v127 = vsel %vm116, %v111, 0
    %129 = vmatprep.subr.bf16.mxu0 %v121
    %130 = vmatpush1.bf16.msra.mxu0 %v118
    %131 = vmatprep.subr.bf16.mxu0 0
    %132 = vmatpush1.bf16.msra.mxu0 0
    %133 = vmatprep.subr.bf16.mxu0 0
    %134 = vmatpush1.bf16.msra.mxu0 0
    %135 = vmatprep.subr.bf16.mxu0 0
    %136 = vmatpush1.bf16.msra.mxu0 0
    %137 = vmatprep.subr.bf16.mxu0 0
    %138 = vmatpush1.bf16.msra.mxu0 0
    %139 = vmatprep.subr.bf16.mxu0 0
    %140 = vmatpush1.bf16.msra.mxu0 0
    %141 = vmatprep.subr.bf16.mxu0 0
    %142 = vmatpush1.bf16.msra.mxu0 0
    %143 = vmatprep.subr.bf16.mxu0 0
    %144 = vmatpush1.bf16.msra.mxu0 0
    %145 = vmatprep.subr.bf16.mxu0 0
    %146 = vmatpush1.bf16.msra.mxu0 0
    %147 = vmatprep.subr.bf16.mxu0 0
    %148 = vmatpush1.bf16.msra.mxu0 0
    %149 = vmatprep.subr.bf16.mxu0 0
    %150 = vmatpush1.bf16.msra.mxu0 0
    %151 = vmatprep.subr.bf16.mxu0 0
    %152 = vmatpush1.bf16.msra.mxu0 0
    %153 = vmatprep.subr.bf16.mxu0 0
    %154 = vmatpush1.bf16.msra.mxu0 0
    %155 = vmatprep.subr.bf16.mxu0 0
    %156 = vmatpush1.bf16.msra.mxu0 0
    %157 = vmatprep.subr.bf16.mxu0 0
    %158 = vmatpush1.bf16.msra.mxu0 0
    %159 = vmatprep.subr.bf16.mxu0 0
    %160 = vmatpush1.bf16.msra.mxu0 0
    %161 = vmatprep.mubr.bf16.mxu0 0
    %162 = vmatmul.mubr.bf16.gmra.mrb[0].mxu0 %v114
    %v163 = vpop.f32.mrb[0].mxu0
    %v164 = vadd.f32 %v79, %v163
    %v165 = vpop.f32.mrb[0].mxu0
    %v166 = vadd.f32 %v83, %v165
    %v167 = vpop.f32.mrb[0].mxu0
    %v168 = vpop.f32.mrb[0].mxu0
    %169 = vdwg.mxu0
    %170 = vmatprep.subr.bf16.mxu0 %v127
    %171 = vmatpush1.bf16.msra.mxu0 %v124
    %172 = vmatprep.subr.bf16.mxu0 0
    %173 = vmatpush1.bf16.msra.mxu0 0
    %174 = vmatprep.subr.bf16.mxu0 0
    %175 = vmatpush1.bf16.msra.mxu0 0
    %176 = vmatprep.subr.bf16.mxu0 0
    %177 = vmatpush1.bf16.msra.mxu0 0
    %178 = vmatprep.subr.bf16.mxu0 0
    %179 = vmatpush1.bf16.msra.mxu0 0
    %180 = vmatprep.subr.bf16.mxu0 0
    %181 = vmatpush1.bf16.msra.mxu0 0
    %182 = vmatprep.subr.bf16.mxu0 0
    %183 = vmatpush1.bf16.msra.mxu0 0
    %184 = vmatprep.subr.bf16.mxu0 0
    %185 = vmatpush1.bf16.msra.mxu0 0
    %186 = vmatprep.subr.bf16.mxu0 0
    %187 = vmatpush1.bf16.msra.mxu0 0
    %188 = vmatprep.subr.bf16.mxu0 0
    %189 = vmatpush1.bf16.msra.mxu0 0
    %190 = vmatprep.subr.bf16.mxu0 0
    %191 = vmatpush1.bf16.msra.mxu0 0
    %192 = vmatprep.subr.bf16.mxu0 0
    %193 = vmatpush1.bf16.msra.mxu0 0
    %194 = vmatprep.subr.bf16.mxu0 0
    %195 = vmatpush1.bf16.msra.mxu0 0
    %196 = vmatprep.subr.bf16.mxu0 0
    %197 = vmatpush1.bf16.msra.mxu0 0
    %198 = vmatprep.subr.bf16.mxu0 0
    %199 = vmatpush1.bf16.msra.mxu0 0
    %200 = vmatprep.subr.bf16.mxu0 0
    %201 = vmatpush1.bf16.msra.mxu0 0
    %202 = vmatprep.mubr.bf16.mxu0 0
    %203 = vmatmul.mubr.bf16.gmra.mrb[0].mxu0 %v114
    %v204 = vpop.f32.mrb[0].mxu0
    %v205 = vadd.f32 %v87, %v204
    %v206 = vpop.f32.mrb[0].mxu0
    %v207 = vadd.f32 %v91, %v206
    %v208 = vpop.f32.mrb[0].mxu0
    %v209 = vpop.f32.mrb[0].mxu0
    %210 = vdwg.mxu0
    %v211 = vmax.f32 %v164, 0.0
    %v212 = vmax.f32 %v166, 0.0
    %v213 = vmax.f32 %v205, 0.0
    %v214 = vmax.f32 %v207, 0.0
    %v215 = vpack.c.bf16 %v211, %v211
    %v216 = vpack.c.bf16 %v212, %v212
    %v217 = vpack.c.bf16 %v213, %v213
    %v218 = vpack.c.bf16 %v214, %v214
    %v219 = vld [vmem:[#allocation7] sm:$0xff]
    %v220 = vld [vmem:[#allocation7 + $0x8] sm:$0xf]
    %v221 = vld [vmem:[#allocation7 + $0xc] sm:$0xff]
    %v222 = vld [vmem:[#allocation7 + $0x14] sm:$0xf]
    %v223 = vld [vmem:[#allocation7 + $0x18] sm:$0xff]
    %v224 = vld [vmem:[#allocation7 + $0x20] sm:$0xf]
    %v225 = vld [vmem:[#allocation7 + $0x24] sm:$0xff]
    %v226 = vld [vmem:[#allocation7 + $0x2c] sm:$0xf]
    %v227 = vld [vmem:[#allocation7 + $0x30] sm:$0xff]
    %v228 = vld [vmem:[#allocation7 + $0x38] sm:$0xf]
    %v229 = vld [vmem:[#allocation7 + $0x3c] sm:$0xff]
    %v230 = vld [vmem:[#allocation7 + $0x44] sm:$0xf]
    %v231 = vld [vmem:[#allocation7 + $0x48] sm:$0xff]
    %v232 = vld [vmem:[#allocation7 + $0x50] sm:$0xf]
    %v233 = vld [vmem:[#allocation7 + $0x54] sm:$0xff]
    %v234 = vld [vmem:[#allocation7 + $0x5c] sm:$0xf]
    %v235 = vld [vmem:[#allocation7 + $0x60] sm:$0xff]
    %v236 = vld [vmem:[#allocation7 + $0x68] sm:$0xf]
    %v237 = vld [vmem:[#allocation7 + $0x6c] sm:$0xff]
    %v238 = vld [vmem:[#allocation7 + $0x74] sm:$0xf]
    %v239 = vld [vmem:[#allocation7 + $0x78] sm:$0xff]
    %v240 = vld [vmem:[#allocation7 + $0x80] sm:$0xf]
    %v241 = vld [vmem:[#allocation7 + $0x84] sm:$0xff]
    %v242 = vld [vmem:[#allocation7 + $0x8c] sm:$0xf]
    %v243 = vld [vmem:[#allocation7 + $0x90] sm:$0xff]
    %v244 = vld [vmem:[#allocation7 + $0x98] sm:$0xf]
    %v245 = vld [vmem:[#allocation7 + $0x9c] sm:$0xff]
    %v246 = vld [vmem:[#allocation7 + $0xa4] sm:$0xf]
    %v247 = vld [vmem:[#allocation7 + $0xa8] sm:$0xff]
    %v248 = vld [vmem:[#allocation7 + $0xb0] sm:$0xf]
    %v249 = vld [vmem:[#allocation7 + $0xb4] sm:$0xff]
    %v250 = vld [vmem:[#allocation7 + $0xbc] sm:$0xf]
    %v251 = vld [vmem:[#allocation7 + $0xc0] sm:$0xff]
    %v252 = vld [vmem:[#allocation7 + $0xc8] sm:$0xf]
    %v253 = vld [vmem:[#allocation7 + $0xcc] sm:$0xff]
    %v254 = vld [vmem:[#allocation7 + $0xd4] sm:$0xf]
    %v255 = vld [vmem:[#allocation7 + $0xd8] sm:$0xff]
    %v256 = vld [vmem:[#allocation7 + $0xe0] sm:$0xf]
    %v257 = vld [vmem:[#allocation7 + $0xe4] sm:$0xff]
    %v258 = vld [vmem:[#allocation7 + $0xec] sm:$0xf]
    %v259 = vld [vmem:[#allocation7 + $0xf0] sm:$0xff]
    %v260 = vld [vmem:[#allocation7 + $0xf8] sm:$0xf]
    %v261 = vld [vmem:[#allocation7 + $0xfc] sm:$0xff]
    %v262 = vld [vmem:[#allocation7 + $0x104] sm:$0xf]
    %v263 = vld [vmem:[#allocation7 + $0x108] sm:$0xff]
    %v264 = vld [vmem:[#allocation7 + $0x110] sm:$0xf]
    %v265 = vld [vmem:[#allocation7 + $0x114] sm:$0xff]
    %v266 = vld [vmem:[#allocation7 + $0x11c] sm:$0xf]
    %v267 = vld [vmem:[#allocation7 + $0x120] sm:$0xff]
    %v268 = vld [vmem:[#allocation7 + $0x128] sm:$0xf]
    %v269 = vld [vmem:[#allocation7 + $0x12c] sm:$0xff]
    %v270 = vld [vmem:[#allocation7 + $0x134] sm:$0xf]
    %v271 = vld [vmem:[#allocation7 + $0x138] sm:$0xff]
    %v272 = vld [vmem:[#allocation7 + $0x140] sm:$0xf]
    %v273 = vld [vmem:[#allocation7 + $0x144] sm:$0xff]
    %v274 = vld [vmem:[#allocation7 + $0x14c] sm:$0xf]
    %v275 = vld [vmem:[#allocation7 + $0x150] sm:$0xff]
    %v276 = vld [vmem:[#allocation7 + $0x158] sm:$0xf]
    %v277 = vld [vmem:[#allocation7 + $0x15c] sm:$0xff]
    %v278 = vld [vmem:[#allocation7 + $0x164] sm:$0xf]
    %v279 = vld [vmem:[#allocation7 + $0x168] sm:$0xff]
    %v280 = vld [vmem:[#allocation7 + $0x170] sm:$0xf]
    %v281 = vld [vmem:[#allocation7 + $0x174] sm:$0xff]
    %v282 = vld [vmem:[#allocation7 + $0x17c] sm:$0xf]
    %v283 = vld [vmem:[#allocation7 + $0x180] sm:$0xff]
    %v284 = vld [vmem:[#allocation7 + $0x188] sm:$0xf]
    %v285 = vld [vmem:[#allocation7 + $0x18c] sm:$0xff]
    %v286 = vld [vmem:[#allocation7 + $0x194] sm:$0xf]
    %v287 = vld [vmem:[#allocation7 + $0x198] sm:$0xff]
    %v288 = vld [vmem:[#allocation7 + $0x1a0] sm:$0xf]
    %v289 = vld [vmem:[#allocation7 + $0x1a4] sm:$0xff]
    %v290 = vld [vmem:[#allocation7 + $0x1ac] sm:$0xf]
    %v291 = vld [vmem:[#allocation7 + $0x1b0] sm:$0xff]
    %v292 = vld [vmem:[#allocation7 + $0x1b8] sm:$0xf]
    %v293 = vld [vmem:[#allocation7 + $0x1bc] sm:$0xff]
    %v294 = vld [vmem:[#allocation7 + $0x1c4] sm:$0xf]
    %v295 = vld [vmem:[#allocation7 + $0x1c8] sm:$0xff]
    %v296 = vld [vmem:[#allocation7 + $0x1d0] sm:$0xf]
    %v297 = vld [vmem:[#allocation7 + $0x1d4] sm:$0xff]
    %v298 = vld [vmem:[#allocation7 + $0x1dc] sm:$0xf]
    %v299 = vld [vmem:[#allocation7 + $0x1e0] sm:$0xff]
    %v300 = vld [vmem:[#allocation7 + $0x1e8] sm:$0xf]
    %v301 = vld [vmem:[#allocation7 + $0x1ec] sm:$0xff]
    %v302 = vld [vmem:[#allocation7 + $0x1f4] sm:$0xf]
    %v303 = vld [vmem:[#allocation7 + $0x1f8] sm:$0xff]
    %v304 = vld [vmem:[#allocation7 + $0x200] sm:$0xf]
    %v305 = vld [vmem:[#allocation7 + $0x204] sm:$0xff]
    %v306 = vld [vmem:[#allocation7 + $0x20c] sm:$0xf]
    %v307 = vld [vmem:[#allocation7 + $0x210] sm:$0xff]
    %v308 = vld [vmem:[#allocation7 + $0x218] sm:$0xf]
    %v309 = vld [vmem:[#allocation7 + $0x21c] sm:$0xff]
    %v310 = vld [vmem:[#allocation7 + $0x224] sm:$0xf]
    %v311 = vld [vmem:[#allocation7 + $0x228] sm:$0xff]
    %v312 = vld [vmem:[#allocation7 + $0x230] sm:$0xf]
    %v313 = vld [vmem:[#allocation7 + $0x234] sm:$0xff]
    %v314 = vld [vmem:[#allocation7 + $0x23c] sm:$0xf]
    %v315 = vld [vmem:[#allocation7 + $0x240] sm:$0xff]
    %v316 = vld [vmem:[#allocation7 + $0x248] sm:$0xf]
    %v317 = vld [vmem:[#allocation7 + $0x24c] sm:$0xff]
    %v318 = vld [vmem:[#allocation7 + $0x254] sm:$0xf]
    %v319 = vld [vmem:[#allocation7 + $0x258] sm:$0xff]
    %v320 = vld [vmem:[#allocation7 + $0x260] sm:$0xf]
    %v321 = vld [vmem:[#allocation7 + $0x264] sm:$0xff]
    %v322 = vld [vmem:[#allocation7 + $0x26c] sm:$0xf]
    %v323 = vld [vmem:[#allocation7 + $0x270] sm:$0xff]
    %v324 = vld [vmem:[#allocation7 + $0x278] sm:$0xf]
    %v325 = vld [vmem:[#allocation7 + $0x27c] sm:$0xff]
    %v326 = vld [vmem:[#allocation7 + $0x284] sm:$0xf]
    %v327 = vld [vmem:[#allocation7 + $0x288] sm:$0xff]
    %v328 = vld [vmem:[#allocation7 + $0x290] sm:$0xf]
    %v329 = vld [vmem:[#allocation7 + $0x294] sm:$0xff]
    %v330 = vld [vmem:[#allocation7 + $0x29c] sm:$0xf]
    %v331 = vld [vmem:[#allocation7 + $0x2a0] sm:$0xff]
    %v332 = vld [vmem:[#allocation7 + $0x2a8] sm:$0xf]
    %v333 = vld [vmem:[#allocation7 + $0x2ac] sm:$0xff]
    %v334 = vld [vmem:[#allocation7 + $0x2b4] sm:$0xf]
    %v335 = vld [vmem:[#allocation7 + $0x2b8] sm:$0xff]
    %v336 = vld [vmem:[#allocation7 + $0x2c0] sm:$0xf]
    %v337 = vld [vmem:[#allocation7 + $0x2c4] sm:$0xff]
    %v338 = vld [vmem:[#allocation7 + $0x2cc] sm:$0xf]
    %v339 = vld [vmem:[#allocation7 + $0x2d0] sm:$0xff]
    %v340 = vld [vmem:[#allocation7 + $0x2d8] sm:$0xf]
    %v341 = vld [vmem:[#allocation7 + $0x2dc] sm:$0xff]
    %v342 = vld [vmem:[#allocation7 + $0x2e4] sm:$0xf]
    %v343 = vld [vmem:[#allocation7 + $0x2e8] sm:$0xff]
    %v344 = vld [vmem:[#allocation7 + $0x2f0] sm:$0xf]
    %v345 = vld [vmem:[#allocation7 + $0x2f4] sm:$0xff]
    %v346 = vld [vmem:[#allocation7 + $0x2fc] sm:$0xf]
    %v347 = vld [vmem:[%s4] sm:$0x7]
    %v349 = vlaneseq
    %v350 = vshrl.u32 %v349, 7
    %v351 = vsub.s32 0, %v350
    %v352 = vrot.slane %v347, %v351
    %v353 = vlaneseq
    %v354 = vshrl.u32 %v353, 7
    %v355 = vsub.s32 1, %v354
    %v356 = vrot.slane %v347, %v355
    %v357 = vlaneseq
    %v358 = vshrl.u32 %v357, 7
    %v359 = vsub.s32 2, %v358
    %v360 = vrot.slane %v347, %v359
    %v492 = vunpack.c.l.b16 %v219
    %v493 = vunpack.c.h.b16 %v219
    %v494 = vunpack.c.l.b16 %v220
    %v495 = vunpack.c.l.b16 %v221
    %v496 = vunpack.c.h.b16 %v221
    %v497 = vunpack.c.l.b16 %v222
    %v498 = vunpack.c.l.b16 %v223
    %v499 = vunpack.c.h.b16 %v223
    %v500 = vunpack.c.l.b16 %v224
    %v501 = vunpack.c.l.b16 %v225
    %v502 = vunpack.c.h.b16 %v225
    %v503 = vunpack.c.l.b16 %v226
    %v504 = vunpack.c.l.b16 %v227
    %v505 = vunpack.c.h.b16 %v227
    %v506 = vunpack.c.l.b16 %v228
    %v507 = vunpack.c.l.b16 %v229
    %v508 = vunpack.c.h.b16 %v229
    %v509 = vunpack.c.l.b16 %v230
    %v510 = vunpack.c.l.b16 %v231
    %v511 = vunpack.c.h.b16 %v231
    %v512 = vunpack.c.l.b16 %v232
    %v513 = vunpack.c.l.b16 %v233
    %v514 = vunpack.c.h.b16 %v233
    %v515 = vunpack.c.l.b16 %v234
    %v516 = vunpack.c.l.b16 %v235
    %v517 = vunpack.c.h.b16 %v235
    %v518 = vunpack.c.l.b16 %v236
    %v519 = vunpack.c.l.b16 %v237
    %v520 = vunpack.c.h.b16 %v237
    %v521 = vunpack.c.l.b16 %v238
    %v522 = vunpack.c.l.b16 %v239
    %v523 = vunpack.c.h.b16 %v239
    %v524 = vunpack.c.l.b16 %v240
    %v525 = vunpack.c.l.b16 %v241
    %v526 = vunpack.c.h.b16 %v241
    %v527 = vunpack.c.l.b16 %v242
    %v528 = vunpack.c.l.b16 %v243
    %v529 = vunpack.c.h.b16 %v243
    %v530 = vunpack.c.l.b16 %v244
    %v531 = vunpack.c.l.b16 %v245
    %v532 = vunpack.c.h.b16 %v245
    %v533 = vunpack.c.l.b16 %v246
    %v534 = vunpack.c.l.b16 %v247
    %v535 = vunpack.c.h.b16 %v247
    %v536 = vunpack.c.l.b16 %v248
    %v537 = vunpack.c.l.b16 %v249
    %v538 = vunpack.c.h.b16 %v249
    %v539 = vunpack.c.l.b16 %v250
    %v540 = vunpack.c.l.b16 %v251
    %v541 = vunpack.c.h.b16 %v251
    %v542 = vunpack.c.l.b16 %v252
    %v543 = vunpack.c.l.b16 %v253
    %v544 = vunpack.c.h.b16 %v253
    %v545 = vunpack.c.l.b16 %v254
    %v546 = vunpack.c.l.b16 %v255
    %v547 = vunpack.c.h.b16 %v255
    %v548 = vunpack.c.l.b16 %v256
    %v549 = vunpack.c.l.b16 %v257
    %v550 = vunpack.c.h.b16 %v257
    %v551 = vunpack.c.l.b16 %v258
    %v552 = vunpack.c.l.b16 %v259
    %v553 = vunpack.c.h.b16 %v259
    %v554 = vunpack.c.l.b16 %v260
    %v555 = vunpack.c.l.b16 %v261
    %v556 = vunpack.c.h.b16 %v261
    %v557 = vunpack.c.l.b16 %v262
    %v558 = vunpack.c.l.b16 %v263
    %v559 = vunpack.c.h.b16 %v263
    %v560 = vunpack.c.l.b16 %v264
    %v561 = vunpack.c.l.b16 %v265
    %v562 = vunpack.c.h.b16 %v265
    %v563 = vunpack.c.l.b16 %v266
    %v564 = vunpack.c.l.b16 %v267
    %v565 = vunpack.c.h.b16 %v267
    %v566 = vunpack.c.l.b16 %v268
    %v567 = vunpack.c.l.b16 %v269
    %v568 = vunpack.c.h.b16 %v269
    %v569 = vunpack.c.l.b16 %v270
    %v570 = vunpack.c.l.b16 %v271
    %v571 = vunpack.c.h.b16 %v271
    %v572 = vunpack.c.l.b16 %v272
    %v573 = vunpack.c.l.b16 %v273
    %v574 = vunpack.c.h.b16 %v273
    %v575 = vunpack.c.l.b16 %v274
    %v576 = vunpack.c.l.b16 %v275
    %v577 = vunpack.c.h.b16 %v275
    %v578 = vunpack.c.l.b16 %v276
    %v579 = vunpack.c.l.b16 %v277
    %v580 = vunpack.c.h.b16 %v277
    %v581 = vunpack.c.l.b16 %v278
    %v582 = vunpack.c.l.b16 %v279
    %v583 = vunpack.c.h.b16 %v279
    %v584 = vunpack.c.l.b16 %v280
    %v585 = vunpack.c.l.b16 %v281
    %v586 = vunpack.c.h.b16 %v281
    %v587 = vunpack.c.l.b16 %v282
    %v588 = vunpack.c.l.b16 %v283
    %v589 = vunpack.c.h.b16 %v283
    %v590 = vunpack.c.l.b16 %v284
    %v591 = vunpack.c.l.b16 %v285
    %v592 = vunpack.c.h.b16 %v285
    %v593 = vunpack.c.l.b16 %v286
    %v594 = vunpack.c.l.b16 %v287
    %v595 = vunpack.c.h.b16 %v287
    %v596 = vunpack.c.l.b16 %v288
    %v597 = vunpack.c.l.b16 %v289
    %v598 = vunpack.c.h.b16 %v289
    %v599 = vunpack.c.l.b16 %v290
    %v600 = vunpack.c.l.b16 %v291
    %v601 = vunpack.c.h.b16 %v291
    %v602 = vunpack.c.l.b16 %v292
    %v603 = vunpack.c.l.b16 %v293
    %v604 = vunpack.c.h.b16 %v293
    %v605 = vunpack.c.l.b16 %v294
    %v606 = vunpack.c.l.b16 %v295
    %v607 = vunpack.c.h.b16 %v295
    %v608 = vunpack.c.l.b16 %v296
    %v609 = vunpack.c.l.b16 %v297
    %v610 = vunpack.c.h.b16 %v297
    %v611 = vunpack.c.l.b16 %v298
    %v612 = vunpack.c.l.b16 %v299
    %v613 = vunpack.c.h.b16 %v299
    %v614 = vunpack.c.l.b16 %v300
    %v615 = vunpack.c.l.b16 %v301
    %v616 = vunpack.c.h.b16 %v301
    %v617 = vunpack.c.l.b16 %v302
    %v618 = vunpack.c.l.b16 %v303
    %v619 = vunpack.c.h.b16 %v303
    %v620 = vunpack.c.l.b16 %v304
    %v621 = vunpack.c.l.b16 %v305
    %v622 = vunpack.c.h.b16 %v305
    %v623 = vunpack.c.l.b16 %v306
    %v624 = vunpack.c.l.b16 %v307
    %v625 = vunpack.c.h.b16 %v307
    %v626 = vunpack.c.l.b16 %v308
    %v627 = vunpack.c.l.b16 %v309
    %v628 = vunpack.c.h.b16 %v309
    %v629 = vunpack.c.l.b16 %v310
    %v630 = vunpack.c.l.b16 %v311
    %v631 = vunpack.c.h.b16 %v311
    %v632 = vunpack.c.l.b16 %v312
    %v633 = vunpack.c.l.b16 %v313
    %v634 = vunpack.c.h.b16 %v313
    %v635 = vunpack.c.l.b16 %v314
    %v636 = vunpack.c.l.b16 %v315
    %v637 = vunpack.c.h.b16 %v315
    %v638 = vunpack.c.l.b16 %v316
    %v639 = vunpack.c.l.b16 %v317
    %v640 = vunpack.c.h.b16 %v317
    %v641 = vunpack.c.l.b16 %v318
    %v642 = vunpack.c.l.b16 %v319
    %v643 = vunpack.c.h.b16 %v319
    %v644 = vunpack.c.l.b16 %v320
    %v645 = vunpack.c.l.b16 %v321
    %v646 = vunpack.c.h.b16 %v321
    %v647 = vunpack.c.l.b16 %v322
    %v648 = vunpack.c.l.b16 %v323
    %v649 = vunpack.c.h.b16 %v323
    %v650 = vunpack.c.l.b16 %v324
    %v651 = vunpack.c.l.b16 %v325
    %v652 = vunpack.c.h.b16 %v325
    %v653 = vunpack.c.l.b16 %v326
    %v654 = vunpack.c.l.b16 %v327
    %v655 = vunpack.c.h.b16 %v327
    %v656 = vunpack.c.l.b16 %v328
    %v657 = vunpack.c.l.b16 %v329
    %v658 = vunpack.c.h.b16 %v329
    %v659 = vunpack.c.l.b16 %v330
    %v660 = vunpack.c.l.b16 %v331
    %v661 = vunpack.c.h.b16 %v331
    %v662 = vunpack.c.l.b16 %v332
    %v663 = vunpack.c.l.b16 %v333
    %v664 = vunpack.c.h.b16 %v333
    %v665 = vunpack.c.l.b16 %v334
    %v666 = vunpack.c.l.b16 %v335
    %v667 = vunpack.c.h.b16 %v335
    %v668 = vunpack.c.l.b16 %v336
    %v669 = vunpack.c.l.b16 %v337
    %v670 = vunpack.c.h.b16 %v337
    %v671 = vunpack.c.l.b16 %v338
    %v672 = vunpack.c.l.b16 %v339
    %v673 = vunpack.c.h.b16 %v339
    %v674 = vunpack.c.l.b16 %v340
    %v675 = vunpack.c.l.b16 %v341
    %v676 = vunpack.c.h.b16 %v341
    %v677 = vunpack.c.l.b16 %v342
    %v678 = vunpack.c.l.b16 %v343
    %v679 = vunpack.c.h.b16 %v343
    %v680 = vunpack.c.l.b16 %v344
    %v681 = vunpack.c.l.b16 %v345
    %v682 = vunpack.c.h.b16 %v345
    %v683 = vunpack.c.l.b16 %v346
    %v684 = vpack.c.b16 %v495, %v492
    %v685 = vpack.c.b16 %v496, %v493
    %v686 = vpack.c.b16 %v497, %v494
    %v687 = vpack.c.b16 %v501, %v498
    %v688 = vpack.c.b16 %v502, %v499
    %v689 = vpack.c.b16 %v503, %v500
    %v690 = vpack.c.b16 %v507, %v504
    %v691 = vpack.c.b16 %v508, %v505
    %v692 = vpack.c.b16 %v509, %v506
    %v693 = vpack.c.b16 %v513, %v510
    %v694 = vpack.c.b16 %v514, %v511
    %v695 = vpack.c.b16 %v515, %v512
    %v696 = vpack.c.b16 %v519, %v516
    %v697 = vpack.c.b16 %v520, %v517
    %v698 = vpack.c.b16 %v521, %v518
    %v699 = vpack.c.b16 %v525, %v522
    %v700 = vpack.c.b16 %v526, %v523
    %v701 = vpack.c.b16 %v527, %v524
    %v702 = vpack.c.b16 %v531, %v528
    %v703 = vpack.c.b16 %v532, %v529
    %v704 = vpack.c.b16 %v533, %v530
    %v705 = vpack.c.b16 %v537, %v534
    %v706 = vpack.c.b16 %v538, %v535
    %v707 = vpack.c.b16 %v539, %v536
    %v708 = vpack.c.b16 %v543, %v540
    %v709 = vpack.c.b16 %v544, %v541
    %v710 = vpack.c.b16 %v545, %v542
    %v711 = vpack.c.b16 %v549, %v546
    %v712 = vpack.c.b16 %v550, %v547
    %v713 = vpack.c.b16 %v551, %v548
    %v714 = vpack.c.b16 %v555, %v552
    %v715 = vpack.c.b16 %v556, %v553
    %v716 = vpack.c.b16 %v557, %v554
    %v717 = vpack.c.b16 %v561, %v558
    %v718 = vpack.c.b16 %v562, %v559
    %v719 = vpack.c.b16 %v563, %v560
    %v720 = vpack.c.b16 %v567, %v564
    %v721 = vpack.c.b16 %v568, %v565
    %v722 = vpack.c.b16 %v569, %v566
    %v723 = vpack.c.b16 %v573, %v570
    %v724 = vpack.c.b16 %v574, %v571
    %v725 = vpack.c.b16 %v575, %v572
    %v726 = vpack.c.b16 %v579, %v576
    %v727 = vpack.c.b16 %v580, %v577
    %v728 = vpack.c.b16 %v581, %v578
    %v729 = vpack.c.b16 %v585, %v582
    %v730 = vpack.c.b16 %v586, %v583
    %v731 = vpack.c.b16 %v587, %v584
    %v732 = vpack.c.b16 %v591, %v588
    %v733 = vpack.c.b16 %v592, %v589
    %v734 = vpack.c.b16 %v593, %v590
    %v735 = vpack.c.b16 %v597, %v594
    %v736 = vpack.c.b16 %v598, %v595
    %v737 = vpack.c.b16 %v599, %v596
    %v738 = vpack.c.b16 %v603, %v600
    %v739 = vpack.c.b16 %v604, %v601
    %v740 = vpack.c.b16 %v605, %v602
    %v741 = vpack.c.b16 %v609, %v606
    %v742 = vpack.c.b16 %v610, %v607
    %v743 = vpack.c.b16 %v611, %v608
    %v744 = vpack.c.b16 %v615, %v612
    %v745 = vpack.c.b16 %v616, %v613
    %v746 = vpack.c.b16 %v617, %v614
    %v747 = vpack.c.b16 %v621, %v618
    %v748 = vpack.c.b16 %v622, %v619
    %v749 = vpack.c.b16 %v623, %v620
    %v750 = vpack.c.b16 %v627, %v624
    %v751 = vpack.c.b16 %v628, %v625
    %v752 = vpack.c.b16 %v629, %v626
    %v753 = vpack.c.b16 %v633, %v630
    %v754 = vpack.c.b16 %v634, %v631
    %v755 = vpack.c.b16 %v635, %v632
    %v756 = vpack.c.b16 %v639, %v636
    %v757 = vpack.c.b16 %v640, %v637
    %v758 = vpack.c.b16 %v641, %v638
    %v759 = vpack.c.b16 %v645, %v642
    %v760 = vpack.c.b16 %v646, %v643
    %v761 = vpack.c.b16 %v647, %v644
    %v762 = vpack.c.b16 %v651, %v648
    %v763 = vpack.c.b16 %v652, %v649
    %v764 = vpack.c.b16 %v653, %v650
    %v765 = vpack.c.b16 %v657, %v654
    %v766 = vpack.c.b16 %v658, %v655
    %v767 = vpack.c.b16 %v659, %v656
    %v768 = vpack.c.b16 %v663, %v660
    %v769 = vpack.c.b16 %v664, %v661
    %v770 = vpack.c.b16 %v665, %v662
    %v771 = vpack.c.b16 %v669, %v666
    %v772 = vpack.c.b16 %v670, %v667
    %v773 = vpack.c.b16 %v671, %v668
    %v774 = vpack.c.b16 %v675, %v672
    %v775 = vpack.c.b16 %v676, %v673
    %v776 = vpack.c.b16 %v677, %v674
    %v777 = vpack.c.b16 %v681, %v678
    %v778 = vpack.c.b16 %v682, %v679
    %v779 = vpack.c.b16 %v683, %v680
    %876 = vmatprep.subr.bf16.mxu0 %v685
    %877 = vmatpush1.bf16.msra.mxu0 %v684
    %878 = vmatprep.subr.bf16.mxu0 %v688
    %879 = vmatpush1.bf16.msra.mxu0 %v687
    %880 = vmatprep.subr.bf16.mxu0 %v691
    %881 = vmatpush1.bf16.msra.mxu0 %v690
    %882 = vmatprep.subr.bf16.mxu0 %v694
    %883 = vmatpush1.bf16.msra.mxu0 %v693
    %884 = vmatprep.subr.bf16.mxu0 %v697
    %885 = vmatpush1.bf16.msra.mxu0 %v696
    %886 = vmatprep.subr.bf16.mxu0 %v700
    %887 = vmatpush1.bf16.msra.mxu0 %v699
    %888 = vmatprep.subr.bf16.mxu0 %v703
    %889 = vmatpush1.bf16.msra.mxu0 %v702
    %890 = vmatprep.subr.bf16.mxu0 %v706
    %891 = vmatpush1.bf16.msra.mxu0 %v705
    %892 = vmatprep.subr.bf16.mxu0 %v709
    %893 = vmatpush1.bf16.msra.mxu0 %v708
    %894 = vmatprep.subr.bf16.mxu0 %v712
    %895 = vmatpush1.bf16.msra.mxu0 %v711
    %896 = vmatprep.subr.bf16.mxu0 %v715
    %897 = vmatpush1.bf16.msra.mxu0 %v714
    %898 = vmatprep.subr.bf16.mxu0 %v718
    %899 = vmatpush1.bf16.msra.mxu0 %v717
    %900 = vmatprep.subr.bf16.mxu0 %v721
    %901 = vmatpush1.bf16.msra.mxu0 %v720
    %902 = vmatprep.subr.bf16.mxu0 %v724
    %903 = vmatpush1.bf16.msra.mxu0 %v723
    %904 = vmatprep.subr.bf16.mxu0 %v727
    %905 = vmatpush1.bf16.msra.mxu0 %v726
    %906 = vmatprep.subr.bf16.mxu0 %v730
    %907 = vmatpush1.bf16.msra.mxu0 %v729
    %908 = vmatprep.mubr.bf16.mxu0 %v216
    %909 = vmatmul.mubr.bf16.gmra.mrb[0].mxu0 %v215
    %v910 = vpop.f32.mrb[0].mxu0
    %v911 = vadd.f32 %v352, %v910
    %v912 = vpop.f32.mrb[0].mxu0
    %v913 = vadd.f32 %v356, %v912
    %v914 = vpop.f32.mrb[0].mxu0
    %v915 = vpop.f32.mrb[0].mxu0
    %916 = vdwg.mxu0
    %917 = vmatprep.subr.bf16.mxu0 %v733
    %918 = vmatpush1.bf16.msra.mxu0 %v732
    %919 = vmatprep.subr.bf16.mxu0 %v736
    %920 = vmatpush1.bf16.msra.mxu0 %v735
    %921 = vmatprep.subr.bf16.mxu0 %v739
    %922 = vmatpush1.bf16.msra.mxu0 %v738
    %923 = vmatprep.subr.bf16.mxu0 %v742
    %924 = vmatpush1.bf16.msra.mxu0 %v741
    %925 = vmatprep.subr.bf16.mxu0 %v745
    %926 = vmatpush1.bf16.msra.mxu0 %v744
    %927 = vmatprep.subr.bf16.mxu0 %v748
    %928 = vmatpush1.bf16.msra.mxu0 %v747
    %929 = vmatprep.subr.bf16.mxu0 %v751
    %930 = vmatpush1.bf16.msra.mxu0 %v750
    %931 = vmatprep.subr.bf16.mxu0 %v754
    %932 = vmatpush1.bf16.msra.mxu0 %v753
    %933 = vmatprep.subr.bf16.mxu0 %v757
    %934 = vmatpush1.bf16.msra.mxu0 %v756
    %935 = vmatprep.subr.bf16.mxu0 %v760
    %936 = vmatpush1.bf16.msra.mxu0 %v759
    %937 = vmatprep.subr.bf16.mxu0 %v763
    %938 = vmatpush1.bf16.msra.mxu0 %v762
    %939 = vmatprep.subr.bf16.mxu0 %v766
    %940 = vmatpush1.bf16.msra.mxu0 %v765
    %941 = vmatprep.subr.bf16.mxu0 %v769
    %942 = vmatpush1.bf16.msra.mxu0 %v768
    %943 = vmatprep.subr.bf16.mxu0 %v772
    %944 = vmatpush1.bf16.msra.mxu0 %v771
    %945 = vmatprep.subr.bf16.mxu0 %v775
    %946 = vmatpush1.bf16.msra.mxu0 %v774
    %947 = vmatprep.subr.bf16.mxu0 %v778
    %948 = vmatpush1.bf16.msra.mxu0 %v777
    %949 = vmatprep.mubr.bf16.mxu0 %v218
    %950 = vmatmul.mubr.bf16.gmra.mrb[0].mxu0 %v217
    %v951 = vpop.f32.mrb[0].mxu0
    %v952 = vadd.f32 %v911, %v951
    %v953 = vpop.f32.mrb[0].mxu0
    %v954 = vadd.f32 %v913, %v953
    %v955 = vpop.f32.mrb[0].mxu0
    %v956 = vpop.f32.mrb[0].mxu0
    %957 = vdwg.mxu0
    %958 = vmatprep.subr.bf16.mxu0 0
    %959 = vmatpush1.bf16.msra.mxu0 %v686
    %960 = vmatprep.subr.bf16.mxu0 0
    %961 = vmatpush1.bf16.msra.mxu0 %v689
    %962 = vmatprep.subr.bf16.mxu0 0
    %963 = vmatpush1.bf16.msra.mxu0 %v692
    %964 = vmatprep.subr.bf16.mxu0 0
    %965 = vmatpush1.bf16.msra.mxu0 %v695
    %966 = vmatprep.subr.bf16.mxu0 0
    %967 = vmatpush1.bf16.msra.mxu0 %v698
    %968 = vmatprep.subr.bf16.mxu0 0
    %969 = vmatpush1.bf16.msra.mxu0 %v701
    %970 = vmatprep.subr.bf16.mxu0 0
    %971 = vmatpush1.bf16.msra.mxu0 %v704
    %972 = vmatprep.subr.bf16.mxu0 0
    %973 = vmatpush1.bf16.msra.mxu0 %v707
    %974 = vmatprep.subr.bf16.mxu0 0
    %975 = vmatpush1.bf16.msra.mxu0 %v710
    %976 = vmatprep.subr.bf16.mxu0 0
    %977 = vmatpush1.bf16.msra.mxu0 %v713
    %978 = vmatprep.subr.bf16.mxu0 0
    %979 = vmatpush1.bf16.msra.mxu0 %v716
    %980 = vmatprep.subr.bf16.mxu0 0
    %981 = vmatpush1.bf16.msra.mxu0 %v719
    %982 = vmatprep.subr.bf16.mxu0 0
    %983 = vmatpush1.bf16.msra.mxu0 %v722
    %984 = vmatprep.subr.bf16.mxu0 0
    %985 = vmatpush1.bf16.msra.mxu0 %v725
    %986 = vmatprep.subr.bf16.mxu0 0
    %987 = vmatpush1.bf16.msra.mxu0 %v728
    %988 = vmatprep.subr.bf16.mxu0 0
    %989 = vmatpush1.bf16.msra.mxu0 %v731
    %990 = vmatprep.mubr.bf16.mxu0 %v216
    %991 = vmatmul.mubr.bf16.gmra.mrb[0].mxu0 %v215
    %v992 = vpop.f32.mrb[0].mxu0
    %v993 = vadd.f32 %v360, %v992
    %v994 = vpop.f32.mrb[0].mxu0
    %v995 = vpop.f32.mrb[0].mxu0
    %v996 = vpop.f32.mrb[0].mxu0
    %997 = vdwg.mxu0
    %998 = vmatprep.subr.bf16.mxu0 0
    %999 = vmatpush1.bf16.msra.mxu0 %v734
    %1000 = vmatprep.subr.bf16.mxu0 0
    %1001 = vmatpush1.bf16.msra.mxu0 %v737
    %1002 = vmatprep.subr.bf16.mxu0 0
    %1003 = vmatpush1.bf16.msra.mxu0 %v740
    %1004 = vmatprep.subr.bf16.mxu0 0
    %1005 = vmatpush1.bf16.msra.mxu0 %v743
    %1006 = vmatprep.subr.bf16.mxu0 0
    %1007 = vmatpush1.bf16.msra.mxu0 %v746
    %1008 = vmatprep.subr.bf16.mxu0 0
    %1009 = vmatpush1.bf16.msra.mxu0 %v749
    %1010 = vmatprep.subr.bf16.mxu0 0
    %1011 = vmatpush1.bf16.msra.mxu0 %v752
    %1012 = vmatprep.subr.bf16.mxu0 0
    %1013 = vmatpush1.bf16.msra.mxu0 %v755
    %1014 = vmatprep.subr.bf16.mxu0 0
    %1015 = vmatpush1.bf16.msra.mxu0 %v758
    %1016 = vmatprep.subr.bf16.mxu0 0
    %1017 = vmatpush1.bf16.msra.mxu0 %v761
    %1018 = vmatprep.subr.bf16.mxu0 0
    %1019 = vmatpush1.bf16.msra.mxu0 %v764
    %1020 = vmatprep.subr.bf16.mxu0 0
    %1021 = vmatpush1.bf16.msra.mxu0 %v767
    %1022 = vmatprep.subr.bf16.mxu0 0
    %1023 = vmatpush1.bf16.msra.mxu0 %v770
    %1024 = vmatprep.subr.bf16.mxu0 0
    %1025 = vmatpush1.bf16.msra.mxu0 %v773
    %1026 = vmatprep.subr.bf16.mxu0 0
    %1027 = vmatpush1.bf16.msra.mxu0 %v776
    %1028 = vmatprep.subr.bf16.mxu0 0
    %1029 = vmatpush1.bf16.msra.mxu0 %v779
    %1030 = vmatprep.mubr.bf16.mxu0 %v218
    %1031 = vmatmul.mubr.bf16.gmra.mrb[0].mxu0 %v217
    %v1032 = vpop.f32.mrb[0].mxu0
    %v1033 = vadd.f32 %v993, %v1032
    %v1034 = vpop.f32.mrb[0].mxu0
    %v1035 = vpop.f32.mrb[0].mxu0
    %v1036 = vpop.f32.mrb[0].mxu0
    %1037 = vdwg.mxu0
    %v1038 = vmax.f32 %v952, 0.0
    %v1039 = vmax.f32 %v954, 0.0
    %v1040 = vmax.f32 %v1033, 0.0
    %v1041 = vld [vmem:[%s5] sm:$0x7]
    %v1043 = vlaneseq
    %v1044 = vshrl.u32 %v1043, 7
    %v1045 = vsub.s32 0, %v1044
    %v1046 = vrot.slane %v1041, %v1045
    %v1047 = vlaneseq
    %v1048 = vshrl.u32 %v1047, 7
    %v1049 = vsub.s32 1, %v1048
    %v1050 = vrot.slane %v1041, %v1049
    %v1051 = vlaneseq
    %v1052 = vshrl.u32 %v1051, 7
    %v1053 = vsub.s32 2, %v1052
    %v1054 = vrot.slane %v1041, %v1053
    %v1058 = vmul.f32 %v1038, %v1046
    %v1059 = vmul.f32 %v1039, %v1050
    %v1060 = vmul.f32 %v1040, %v1054
    %v1061 = vadd.f32 %v1058, %v1059
    %v1062 = vadd.f32 %v1061, %v1060
    %1063 = vadd.xlane.f32.xlu0 %v1062
    %v1064 = vpop.xlane.xlu0 %1063
    %v1065 = vld [vmem:[#allocation2] sm:$0x1]
    %v1067 = vlaneseq
    %v1068 = vshrl.u32 %v1067, 7
    %v1069 = vsub.s32 0, %v1068
    %v1070 = vrot.slane %v1065, %v1069
    %v1072 = vadd.f32 %v1064, %v1070
    %vm1073 = vcmask 7168
    %1074 = vst.msk [vmem:[%s7] sm:$0xff] %vm1073, %v1072
    // Predicated region
    $region42: #{tpu_custom_call.1} parent=1 // pred_check
      _
    $region43: #{tpu_custom_call.1} parent=1 // pred_check_branch
      %1076 = sbr.rel (0) target = $region45
    $region44: #{tpu_custom_call.1} parent=1 // pred_region
      _
    $region45: #{tpu_custom_call.1} parent=1 // pred_fallthru
      _
    // Predicated region
    $region46: #{tpu_custom_call.1} parent=1 // pred_check
      _
    $region47: #{tpu_custom_call.1} parent=1 // pred_check_branch
      %1078 = sbr.rel (0) target = $region49
    $region48: #{tpu_custom_call.1} parent=1 // pred_region
      _
    $region49: #{tpu_custom_call.1} parent=1 // pred_fallthru
      _
    %1079 = vsyncpa [#allocation4], 1
    %1080 = vsyncpa [#allocation6], 1

</llo_original>
